<compile_context>
chip_gen: v6e
topology: v6e:2x2x1
jax: 0.10.0
libtpu: 0.0.40
codegen_flags: <defaults>
</compile_context>

<pallas_src>
import functools

import jax
import jax.numpy as jnp
from jax.experimental import pallas as pl
from jax.experimental.pallas import tpu as pltpu


def _round_up(x: int, m: int) -> int:
    return ((x + m - 1) // m) * m


def _mlp_fused_kernel(x_ref, w_ref, b_ref, o_ref, *, dims, col_offs):
    """One batch tile through the whole MLP, feature-major (batch on the lane axis).

    x_ref: (in0, tile_b)          activations for this batch tile
    w_ref: (rows_pad, cols_pad)   all layer weights packed; layer i lives at
                                  [0:out_i, col_offs[i]:col_offs[i]+in_i]  (PyTorch (out, in))
    b_ref: (rows_pad, n_layers)   layer i bias in column i, rows [0:out_i]
    o_ref: (out_last, tile_b)
    """
    n_layers = len(dims)
    h = x_ref[...]
    for i, ((out_d, in_d), off) in enumerate(zip(dims, col_offs)):
        w = w_ref[0:out_d, off:off + in_d]        # static slice -> (out_d, in_d)
        b = b_ref[0:out_d, i:i + 1]               # (out_d, 1), broadcasts over lanes
        h = jnp.dot(w, h,
                    preferred_element_type=jnp.float32,
                    precision=jax.lax.Precision.HIGHEST) + b
        if i < n_layers - 1:
            h = jnp.tanh(h)                       # lane-dense EUP work
    o_ref[...] = h.astype(o_ref.dtype)


def pack_mlp_params(params):
    """Pack PyTorch-layout params into two slabs (fewer kernel operands).

    params: list of (W, b) with W: (out, in) (nn.Linear layout) and b: (out,).
    Returns (w_slab, b_slab, dims, col_offs).
    """
    dims = tuple((int(w.shape[0]), int(w.shape[1])) for w, _ in params)
    rows = _round_up(max(o for o, _ in dims), 8)
    col_offs, cols = [], 0
    for _, in_d in dims:
        col_offs.append(cols)
        cols += _round_up(in_d, 128)              # 128-aligned start per layer
    w_slab = jnp.zeros((rows, cols), jnp.float32)
    b_slab = jnp.zeros((rows, len(dims)), jnp.float32)
    for i, ((out_d, in_d), off, (w, b)) in enumerate(zip(dims, col_offs, params)):
        w_slab = w_slab.at[:out_d, off:off + in_d].set(w.astype(jnp.float32))
        b_slab = b_slab.at[:out_d, i].set(b.astype(jnp.float32))
    return w_slab, b_slab, dims, tuple(col_offs)


def mlp_forward(x, packed, *, batch_tile: int = 2048):
    """MLP forward: x (B, in0) -> (B, out_last), one fused Pallas call.

    The kernel runs feature-major (batch on lanes); the wrapper transposes/pads x, tiles the
    padded batch over the grid, and undoes the layout at the end (layout plumbing only).
    """
    w_slab, b_slab, dims, col_offs = packed
    B, in_dim = x.shape
    assert in_dim == dims[0][1], (in_dim, dims)
    out_dim = dims[-1][0]

    # Lane-dense tiling of the batch axis: tile is always a multiple of 128.
    batch_tile = max(128, _round_up(batch_tile, 128))
    tile_b = min(batch_tile, _round_up(B, 128))
    b_pad = _round_up(B, tile_b)
    num_steps = b_pad // tile_b
    # v7x has 2 TensorCores: a "parallel" grid only helps with >=1 step/core and pipelines
    # with >=2 steps/core, so prefer >=4 steps over one huge tile when the batch allows.
    while num_steps in (2, 3) and tile_b >= 1024:
        tile_b //= 2
        b_pad = _round_up(B, tile_b)
        num_steps = b_pad // tile_b

    xt = x.T.astype(jnp.float32)                  # (in0, B), batch on lanes
    if b_pad != B:
        xt = jnp.pad(xt, ((0, 0), (0, b_pad - B)))

    kernel = functools.partial(_mlp_fused_kernel, dims=dims, col_offs=col_offs)

    # TODO(synk): for scaled-up hidden dims, single-buffer the replicated slabs
    # (pipeline_mode=pl.Buffered(1)) and/or store them bf16 to halve the resident VMEM
    # footprint (matters most on v7x's 64 MiB VMEM); irrelevant at 16->32->32->8.
    yt = pl.pallas_call(
        kernel,
        out_shape=jax.ShapeDtypeStruct((out_dim, b_pad), jnp.float32),
        grid=(num_steps,),
        in_specs=[
            pl.BlockSpec((in_dim, tile_b), lambda i: (0, i)),   # batch-tiled activations
            pl.BlockSpec(w_slab.shape, lambda i: (0, 0)),       # resident weight slab
            pl.BlockSpec(b_slab.shape, lambda i: (0, 0)),       # resident bias slab
        ],
        out_specs=pl.BlockSpec((out_dim, tile_b), lambda i: (0, i)),
        compiler_params=pltpu.CompilerParams(
            dimension_semantics=("parallel",),
            vmem_limit_bytes=32 * 1024 * 1024,
        ),
    )(xt, w_slab, b_slab)

    return yt[:, :B].T                            # back to (B, out_last)


def init_mlp_params(key, sizes, bias=True):
    """nn.Linear-style init (uniform +-1/sqrt(fan_in)); PyTorch (out, in) weight layout."""
    params = []
    for i in range(len(sizes) - 1):
        fan_in, fan_out = sizes[i], sizes[i + 1]
        key, kw, kb = jax.random.split(key, 3)
        bound = 1.0 / jnp.sqrt(jnp.float32(fan_in))
        w = jax.random.uniform(kw, (fan_out, fan_in), jnp.float32, -bound, bound)
        if bias:
            b = jax.random.uniform(kb, (fan_out,), jnp.float32, -bound, bound)
        else:
            b = jnp.zeros((fan_out,), jnp.float32)
        params.append((w, b))
    return params


def _reference(x, params):
    h = x
    n = len(params)
    for i, (w, b) in enumerate(params):
        h = jnp.dot(h, w.T, precision=jax.lax.Precision.HIGHEST) + b
        if i < n - 1:
            h = jnp.tanh(h)
    return h


if __name__ == "__main__":
    # Shapes consistent with MLP(sizes=(16, 32, 32, 8))
    sizes = (16, 32, 32, 8)
    key = jax.random.PRNGKey(0)
    key, kx1, kx2 = jax.random.split(key, 3)
    params = init_mlp_params(key, sizes, bias=True)
    packed = pack_mlp_params(params)

    # Small batch: single lane-padded tile, one grid step.
    x1 = jax.random.normal(kx1, (2, sizes[0]), jnp.float32)
    y1 = jax.block_until_ready(mlp_forward(x1, packed))
    assert y1.shape == (2, sizes[-1])
    assert jnp.allclose(y1, _reference(x1, params), atol=1e-4, rtol=1e-4)

    # Batch that is not a tile multiple: exercises the padded tiled path (no VMEM cliff).
    x2 = jax.random.normal(kx2, (300, sizes[0]), jnp.float32)
    y2 = jax.block_until_ready(mlp_forward(x2, packed))
    assert y2.shape == (300, sizes[-1])
    assert jnp.allclose(y2, _reference(x2, params), atol=1e-4, rtol=1e-4)

    print("KERNEL_OK")
</pallas_src>

<mosaic_0001>
module attributes {stable_mosaic.version = 11 : i64} {
  func.func @_mlp_fused_kernel(%arg0: i32, %arg1: memref<16x128xf32, #tpu.memory_space<vmem>>, %arg2: memref<32x384xf32, #tpu.memory_space<vmem>>, %arg3: memref<32x3xf32, #tpu.memory_space<vmem>>, %arg4: memref<8x128xf32, #tpu.memory_space<vmem>>) attributes {dimension_semantics = [#tpu.dimension_semantics<parallel>], iteration_bounds = array<i64: 1>, scalar_prefetch = 0 : i64, scratch_operands = 0 : i64, tpu.core_type = #tpu.core_type<tc>, window_params = [{transform_indices = @transform_0, window_bounds = array<i64: 16, 128>}, {pipeline_mode = #tpu.pipeline_mode<synchronous>, transform_indices = @transform_1, window_bounds = array<i64: 32, 384>}, {pipeline_mode = #tpu.pipeline_mode<synchronous>, transform_indices = @transform_2, window_bounds = array<i64: 32, 3>}, {transform_indices = @transform_3, window_bounds = array<i64: 8, 128>}]} {
    %c0 = arith.constant 0 : index
    %c0_0 = arith.constant 0 : index
    %0 = vector.load %arg1[%c0, %c0_0] : memref<16x128xf32, #tpu.memory_space<vmem>>, vector<16x128xf32>
    %c0_1 = arith.constant 0 : index
    %c0_2 = arith.constant 0 : index
    %1 = vector.load %arg2[%c0_1, %c0_2] : memref<32x384xf32, #tpu.memory_space<vmem>>, vector<32x16xf32>
    %c0_3 = arith.constant 0 : index
    %c0_4 = arith.constant 0 : index
    %2 = vector.load %arg3[%c0_3, %c0_4] : memref<32x3xf32, #tpu.memory_space<vmem>>, vector<32x1xf32>
    %cst = arith.constant dense<0.000000e+00> : vector<32x128xf32>
    %3 = tpu.matmul %1, %0, %cst {dimension_numbers = #tpu.dot_dimension_numbers<[1], [0], [0], [1], [0, 0, 1, 1], [], []>, precision = #tpu.contract_precision<fp32>} : vector<32x16xf32>, vector<16x128xf32>, vector<32x128xf32> -> vector<32x128xf32>
    %4 = vector.broadcast %2 : vector<32x1xf32> to vector<32x128xf32>
    %5 = arith.addf %3, %4 : vector<32x128xf32>
    %6 = math.tanh %5 : vector<32x128xf32>
    %c0_5 = arith.constant 0 : index
    %c128 = arith.constant 128 : index
    %7 = vector.load %arg2[%c0_5, %c128] : memref<32x384xf32, #tpu.memory_space<vmem>>, vector<32x32xf32>
    %c0_6 = arith.constant 0 : index
    %c1 = arith.constant 1 : index
    %8 = vector.load %arg3[%c0_6, %c1] : memref<32x3xf32, #tpu.memory_space<vmem>>, vector<32x1xf32>
    %cst_7 = arith.constant dense<0.000000e+00> : vector<32x128xf32>
    %9 = tpu.matmul %7, %6, %cst_7 {dimension_numbers = #tpu.dot_dimension_numbers<[1], [0], [0], [1], [0, 0, 1, 1], [], []>, precision = #tpu.contract_precision<fp32>} : vector<32x32xf32>, vector<32x128xf32>, vector<32x128xf32> -> vector<32x128xf32>
    %10 = vector.broadcast %8 : vector<32x1xf32> to vector<32x128xf32>
    %11 = arith.addf %9, %10 : vector<32x128xf32>
    %12 = math.tanh %11 : vector<32x128xf32>
    %c0_8 = arith.constant 0 : index
    %c256 = arith.constant 256 : index
    %13 = vector.load %arg2[%c0_8, %c256] : memref<32x384xf32, #tpu.memory_space<vmem>>, vector<8x32xf32>
    %c0_9 = arith.constant 0 : index
    %c2 = arith.constant 2 : index
    %14 = vector.load %arg3[%c0_9, %c2] : memref<32x3xf32, #tpu.memory_space<vmem>>, vector<8x1xf32>
    %cst_10 = arith.constant dense<0.000000e+00> : vector<8x128xf32>
    %15 = tpu.matmul %13, %12, %cst_10 {dimension_numbers = #tpu.dot_dimension_numbers<[1], [0], [0], [1], [0, 0, 1, 1], [], []>, precision = #tpu.contract_precision<fp32>} : vector<8x32xf32>, vector<32x128xf32>, vector<8x128xf32> -> vector<8x128xf32>
    %16 = vector.broadcast %14 : vector<8x1xf32> to vector<8x128xf32>
    %17 = arith.addf %15, %16 : vector<8x128xf32>
    %c0_11 = arith.constant 0 : index
    %c0_12 = arith.constant 0 : index
    %18 = vector.load %arg4[%c0_11, %c0_12] : memref<8x128xf32, #tpu.memory_space<vmem>>, vector<8x128xf32>
    tpu.vector_store %arg4[%c0_11, %c0_12], %17 {strides = array<i32>} : memref<8x128xf32, #tpu.memory_space<vmem>>, vector<8x128xf32>,
    return
  }
  func.func @transform_0(%arg0: i32) -> (i32, i32) {
    %c0_i32 = arith.constant 0 : i32
    %c0_i32_0 = arith.constant 0 : i32
    return %c0_i32, %arg0 : i32, i32
  }
  func.func @transform_1(%arg0: i32) -> (i32, i32) {
    %c0_i32 = arith.constant 0 : i32
    %c0_i32_0 = arith.constant 0 : i32
    %c0_i32_1 = arith.constant 0 : i32
    return %c0_i32, %c0_i32_0 : i32, i32
  }
  func.func @transform_2(%arg0: i32) -> (i32, i32) {
    %c0_i32 = arith.constant 0 : i32
    %c0_i32_0 = arith.constant 0 : i32
    %c0_i32_1 = arith.constant 0 : i32
    return %c0_i32, %c0_i32_0 : i32, i32
  }
  func.func @transform_3(%arg0: i32) -> (i32, i32) {
    %c0_i32 = arith.constant 0 : i32
    %c0_i32_0 = arith.constant 0 : i32
    return %c0_i32, %arg0 : i32, i32
  }
}

</mosaic_0001>

<llo_original>
// kernel: tpu_custom_call.1
$region0: #{tpu_custom_call.1}
  #allocation0 [shape = 'u32[]', space=smem, size = 0x4, offset = 0x4, fixed_abs, tag = 'smem constant byte address 0x4 - core index']
  #allocation1 [shape = 'u32[144,128]{1,0:T(1,128)}', space=vmem, size = 0x12000, scoped, tag = 'internal scratch']
  %s0 = inlined_call_operand.vmem [shape: f32[16,128], index: 0, kind: input, shape index: {}]
  %s1 = inlined_call_operand.hbm [shape: f32[32,384], index: 1, kind: input, shape index: {}]
  %s2 = inlined_call_operand.vmem [shape: f32[32,3], index: 2, kind: input, shape index: {}]
  %s3 = inlined_call_operand.hbm [shape: f32[8,128], index: 3, kind: output, shape index: {}]
  %s4 = sld [smem:[#allocation0]]
  $region26: #{tpu_custom_call.1} parent=0
    _
  %s6 = ssub.s32 1, %s4
  %s7 = scalar_select 0, %s6, %s4
  $region1: #{tpu_custom_call.1} parent=0
    #allocation2 [shape = 'u8[49152]{0}', space=vmem, size = 0xc000, scoped, tag = 'input window, operand 1, single buffered']
    #allocation3 [shape = 's32[1]{0}', space=sflag, size = 0x4, scoped, tag = 'scoped memory for tpu_custom_call.1']
    #allocation4 [shape = 's32[1]{0}', space=sflag, size = 0x4, scoped, tag = 'scoped memory for tpu_custom_call.1']
    #allocation5 [shape = 'u8[4096]{0}', space=vmem, size = 0x1000, scoped, tag = 'output window, operand 0, single buffered']
    %8 = vsyncpa [#allocation3], 0
    %9 = vsyncpa [#allocation4], 0
    // Predicated region
    $region2: #{tpu_custom_call.1} parent=1 // pred_check
      _
    $region3: #{tpu_custom_call.1} parent=1 // pred_check_branch
      %11 = sbr.rel (0) target = $region5
    $region4: #{tpu_custom_call.1} parent=1 // pred_region
      _
    $region5: #{tpu_custom_call.1} parent=1 // pred_fallthru
      _
    // Predicated region
    $region6: #{tpu_custom_call.1} parent=1 // pred_check
      _
    $region7: #{tpu_custom_call.1} parent=1 // pred_check_branch
      %13 = sbr.rel (0) target = $region9
    $region8: #{tpu_custom_call.1} parent=1 // pred_region
      %s15 = ssub.s32 1536, 1536
      %16 = vsyncadd [#allocation3], %s15
      %s17 = sshll.u32 [#allocation2], 4
      %s18 = int_to_ptr.vmem [resolvable:$true] %s17
      %23 = dma.hbm_to_vmem [thread:$0]  %s1, 1536, %s18, [#allocation3], 384, 384, 24
    $region9: #{tpu_custom_call.1} parent=1 // pred_fallthru
      _
    // Predicated region
    $region10: #{tpu_custom_call.1} parent=1 // pred_check
      _
    $region11: #{tpu_custom_call.1} parent=1 // pred_check_branch
      %25 = sbr.rel (0) target = $region13
    $region12: #{tpu_custom_call.1} parent=1 // pred_region
      _
    $region13: #{tpu_custom_call.1} parent=1 // pred_fallthru
      _
    // Predicated region
    $region14: #{tpu_custom_call.1} parent=1 // pred_check
      _
    $region15: #{tpu_custom_call.1} parent=1 // pred_check_branch
      %27 = sbr.rel (0) target = $region17
    $region16: #{tpu_custom_call.1} parent=1 // pred_region
      %28 = dma.done [#allocation3], 1536
    $region17: #{tpu_custom_call.1} parent=1 // pred_fallthru
      _
    %v29 = vld [vmem:[%s0] sm:$0xff]
    %v30 = vld [vmem:[%s0 + $0x8] sm:$0xff]
    %v31 = vld [vmem:[#allocation2] sm:$0xff]
    %v32 = vld [vmem:[#allocation2 + $0x18] sm:$0xff]
    %v33 = vld [vmem:[#allocation2 + $0x30] sm:$0xff]
    %v34 = vld [vmem:[#allocation2 + $0x48] sm:$0xff]
    %v35 = vld [vmem:[%s2] sm:$0xff]
    %v36 = vld [vmem:[%s2 + $0x8] sm:$0xff]
    %v37 = vld [vmem:[%s2 + $0x10] sm:$0xff]
    %v38 = vld [vmem:[%s2 + $0x18] sm:$0xff]
    %40 = vset.pattern.permute.xlu0 0
    %41 = vperm.xlu0 %40, %v35
    %v42 = vpop.permute.xlu0 %41
    %45 = vset.pattern.permute.xlu0 0
    %46 = vperm.xlu0 %45, %v36
    %v47 = vpop.permute.xlu0 %46
    %50 = vset.pattern.permute.xlu0 0
    %51 = vperm.xlu0 %50, %v37
    %v52 = vpop.permute.xlu0 %51
    %55 = vset.pattern.permute.xlu0 0
    %56 = vperm.xlu0 %55, %v38
    %v57 = vpop.permute.xlu0 %56
    %vm59 = vcmask 130048
    %v61 = vsel %vm59, %v31, 0
    %v64 = vsel %vm59, %v32, 0
    %v67 = vsel %vm59, %v33, 0
    %v70 = vsel %vm59, %v34, 0
    %72 = vmatprep.subr.mxu0 0.0
    %73 = vmatpush1.msra.mxu0 0.0
    %74 = vmatprep.subr.mxu0 0.0
    %75 = vmatpush1.msra.mxu0 0.0
    %76 = vmatprep.subr.mxu0 0.0
    %77 = vmatpush1.msra.mxu0 0.0
    %78 = vmatprep.subr.mxu0 0.0
    %79 = vmatpush1.msra.mxu0 0.0
    %80 = vmatprep.subr.mxu0 0.0
    %81 = vmatpush1.msra.mxu0 0.0
    %82 = vmatprep.subr.mxu0 0.0
    %83 = vmatpush1.msra.mxu0 0.0
    %84 = vmatprep.subr.mxu0 0.0
    %85 = vmatpush1.msra.mxu0 0.0
    %86 = vmatprep.subr.mxu0 0.0
    %87 = vmatpush1.msra.mxu0 0.0
    %88 = vmatprep.subr.mxu0 0.0
    %89 = vmatpush1.msra.mxu0 0.0
    %90 = vmatprep.subr.mxu0 0.0
    %91 = vmatpush1.msra.mxu0 0.0
    %92 = vmatprep.subr.mxu0 0.0
    %93 = vmatpush1.msra.mxu0 0.0
    %94 = vmatprep.subr.mxu0 0.0
    %95 = vmatpush1.msra.mxu0 0.0
    %96 = vmatprep.subr.mxu0 0.0
    %97 = vmatpush1.msra.mxu0 0.0
    %98 = vmatprep.subr.mxu0 0.0
    %99 = vmatpush1.msra.mxu0 0.0
    %100 = vmatprep.subr.mxu0 0.0
    %v101 = vand.u32 %v30, 4294901760
    %102 = vmatpush1.msra.mxu0 %v101
    %103 = vmatprep.subr.mxu0 0.0
    %v104 = vand.u32 %v29, 4294901760
    %105 = vmatpush1.msra.mxu0 %v104
    %106 = vmatprep.subr.mxu0 0.0
    %107 = vmatpush2.msra.mxu0 0.0
    %108 = vmatprep.subr.mxu0 0.0
    %109 = vmatpush2.msra.mxu0 0.0
    %110 = vmatprep.subr.mxu0 0.0
    %111 = vmatpush2.msra.mxu0 0.0
    %112 = vmatprep.subr.mxu0 0.0
    %113 = vmatpush2.msra.mxu0 0.0
    %114 = vmatprep.subr.mxu0 0.0
    %115 = vmatpush2.msra.mxu0 0.0
    %116 = vmatprep.subr.mxu0 0.0
    %117 = vmatpush2.msra.mxu0 0.0
    %118 = vmatprep.subr.mxu0 0.0
    %119 = vmatpush2.msra.mxu0 0.0
    %120 = vmatprep.subr.mxu0 0.0
    %121 = vmatpush2.msra.mxu0 0.0
    %122 = vmatprep.subr.mxu0 0.0
    %123 = vmatpush2.msra.mxu0 0.0
    %124 = vmatprep.subr.mxu0 0.0
    %125 = vmatpush2.msra.mxu0 0.0
    %126 = vmatprep.subr.mxu0 0.0
    %127 = vmatpush2.msra.mxu0 0.0
    %128 = vmatprep.subr.mxu0 0.0
    %129 = vmatpush2.msra.mxu0 0.0
    %130 = vmatprep.subr.mxu0 0.0
    %131 = vmatpush2.msra.mxu0 0.0
    %132 = vmatprep.subr.mxu0 0.0
    %133 = vmatpush2.msra.mxu0 0.0
    %134 = vmatprep.subr.mxu0 0.0
    %135 = vmatpush2.msra.mxu0 0.0
    %136 = vmatprep.subr.mxu0 0.0
    %137 = vmatpush2.msra.mxu0 0.0
    %138 = vmatprep.mubr.f32.mxu0 0.0
    %v139 = vand.u32 %v61, 4294901760
    %v140 = vsub.f32 %v61, %v139
    %v141 = vand.u32 %v140, 4294901760
    %v142 = vsub.f32 %v140, %v141
    %v143 = vand.u32 %v142, 4294901760
    %144 = vmatmul.mubr.f32.gmra.mxu0 %v143
    %v145 = vpop.f32.mrf.mxu0
    %v146 = vadd.f32 %v42, %v145
    %v147 = vpop.f32.mrf.mxu0
    %148 = vmatprep.mubr.f32.mxu0 0.0
    %v149 = vand.u32 %v64, 4294901760
    %v150 = vsub.f32 %v64, %v149
    %v151 = vand.u32 %v150, 4294901760
    %v152 = vsub.f32 %v150, %v151
    %v153 = vand.u32 %v152, 4294901760
    %154 = vmatmul.mubr.f32.gmra.mxu0 %v153
    %v155 = vpop.f32.mrf.mxu0
    %v156 = vadd.f32 %v47, %v155
    %v157 = vpop.f32.mrf.mxu0
    %158 = vmatprep.mubr.f32.mxu0 0.0
    %v159 = vand.u32 %v67, 4294901760
    %v160 = vsub.f32 %v67, %v159
    %v161 = vand.u32 %v160, 4294901760
    %v162 = vsub.f32 %v160, %v161
    %v163 = vand.u32 %v162, 4294901760
    %164 = vmatmul.mubr.f32.gmra.mxu0 %v163
    %v165 = vpop.f32.mrf.mxu0
    %v166 = vadd.f32 %v52, %v165
    %v167 = vpop.f32.mrf.mxu0
    %168 = vmatprep.mubr.f32.mxu0 0.0
    %v169 = vand.u32 %v70, 4294901760
    %v170 = vsub.f32 %v70, %v169
    %v171 = vand.u32 %v170, 4294901760
    %v172 = vsub.f32 %v170, %v171
    %v173 = vand.u32 %v172, 4294901760
    %174 = vmatmul.mubr.f32.gmra.mxu0 %v173
    %v175 = vpop.f32.mrf.mxu0
    %v176 = vadd.f32 %v57, %v175
    %v177 = vpop.f32.mrf.mxu0
    %178 = vdwg.mxu0
    %179 = vmatprep.subr.mxu0 0.0
    %180 = vmatpush1.msra.mxu0 0.0
    %181 = vmatprep.subr.mxu0 0.0
    %182 = vmatpush1.msra.mxu0 0.0
    %183 = vmatprep.subr.mxu0 0.0
    %184 = vmatpush1.msra.mxu0 0.0
    %185 = vmatprep.subr.mxu0 0.0
    %186 = vmatpush1.msra.mxu0 0.0
    %187 = vmatprep.subr.mxu0 0.0
    %188 = vmatpush1.msra.mxu0 0.0
    %189 = vmatprep.subr.mxu0 0.0
    %190 = vmatpush1.msra.mxu0 0.0
    %191 = vmatprep.subr.mxu0 0.0
    %192 = vmatpush1.msra.mxu0 0.0
    %193 = vmatprep.subr.mxu0 0.0
    %194 = vmatpush1.msra.mxu0 0.0
    %195 = vmatprep.subr.mxu0 0.0
    %196 = vmatpush1.msra.mxu0 0.0
    %197 = vmatprep.subr.mxu0 0.0
    %198 = vmatpush1.msra.mxu0 0.0
    %199 = vmatprep.subr.mxu0 0.0
    %200 = vmatpush1.msra.mxu0 0.0
    %201 = vmatprep.subr.mxu0 0.0
    %202 = vmatpush1.msra.mxu0 0.0
    %203 = vmatprep.subr.mxu0 0.0
    %204 = vmatpush1.msra.mxu0 0.0
    %205 = vmatprep.subr.mxu0 0.0
    %206 = vmatpush1.msra.mxu0 0.0
    %207 = vmatprep.subr.mxu0 0.0
    %v208 = vand.u32 %v30, 4294901760
    %v209 = vsub.f32 %v30, %v208
    %v210 = vand.u32 %v209, 4294901760
    %v211 = vsub.f32 %v209, %v210
    %v212 = vand.u32 %v211, 4294901760
    %213 = vmatpush1.msra.mxu0 %v212
    %214 = vmatprep.subr.mxu0 0.0
    %v215 = vand.u32 %v29, 4294901760
    %v216 = vsub.f32 %v29, %v215
    %v217 = vand.u32 %v216, 4294901760
    %v218 = vsub.f32 %v216, %v217
    %v219 = vand.u32 %v218, 4294901760
    %220 = vmatpush1.msra.mxu0 %v219
    %221 = vmatprep.subr.mxu0 0.0
    %222 = vmatpush2.msra.mxu0 0.0
    %223 = vmatprep.subr.mxu0 0.0
    %224 = vmatpush2.msra.mxu0 0.0
    %225 = vmatprep.subr.mxu0 0.0
    %226 = vmatpush2.msra.mxu0 0.0
    %227 = vmatprep.subr.mxu0 0.0
    %228 = vmatpush2.msra.mxu0 0.0
    %229 = vmatprep.subr.mxu0 0.0
    %230 = vmatpush2.msra.mxu0 0.0
    %231 = vmatprep.subr.mxu0 0.0
    %232 = vmatpush2.msra.mxu0 0.0
    %233 = vmatprep.subr.mxu0 0.0
    %234 = vmatpush2.msra.mxu0 0.0
    %235 = vmatprep.subr.mxu0 0.0
    %236 = vmatpush2.msra.mxu0 0.0
    %237 = vmatprep.subr.mxu0 0.0
    %238 = vmatpush2.msra.mxu0 0.0
    %239 = vmatprep.subr.mxu0 0.0
    %240 = vmatpush2.msra.mxu0 0.0
    %241 = vmatprep.subr.mxu0 0.0
    %242 = vmatpush2.msra.mxu0 0.0
    %243 = vmatprep.subr.mxu0 0.0
    %244 = vmatpush2.msra.mxu0 0.0
    %245 = vmatprep.subr.mxu0 0.0
    %246 = vmatpush2.msra.mxu0 0.0
    %247 = vmatprep.subr.mxu0 0.0
    %248 = vmatpush2.msra.mxu0 0.0
    %249 = vmatprep.subr.mxu0 0.0
    %250 = vmatpush2.msra.mxu0 0.0
    %251 = vmatprep.subr.mxu0 0.0
    %252 = vmatpush2.msra.mxu0 0.0
    %253 = vmatprep.mubr.f32.mxu0 0.0
    %v254 = vand.u32 %v61, 4294901760
    %255 = vmatmul.mubr.f32.gmra.mxu0 %v254
    %v256 = vpop.f32.mrf.mxu0
    %v257 = vadd.f32 %v146, %v256
    %v258 = vpop.f32.mrf.mxu0
    %259 = vmatprep.mubr.f32.mxu0 0.0
    %v260 = vand.u32 %v64, 4294901760
    %261 = vmatmul.mubr.f32.gmra.mxu0 %v260
    %v262 = vpop.f32.mrf.mxu0
    %v263 = vadd.f32 %v156, %v262
    %v264 = vpop.f32.mrf.mxu0
    %265 = vmatprep.mubr.f32.mxu0 0.0
    %v266 = vand.u32 %v67, 4294901760
    %267 = vmatmul.mubr.f32.gmra.mxu0 %v266
    %v268 = vpop.f32.mrf.mxu0
    %v269 = vadd.f32 %v166, %v268
    %v270 = vpop.f32.mrf.mxu0
    %271 = vmatprep.mubr.f32.mxu0 0.0
    %v272 = vand.u32 %v70, 4294901760
    %273 = vmatmul.mubr.f32.gmra.mxu0 %v272
    %v274 = vpop.f32.mrf.mxu0
    %v275 = vadd.f32 %v176, %v274
    %v276 = vpop.f32.mrf.mxu0
    %277 = vdwg.mxu0
    %278 = vmatprep.subr.mxu0 0.0
    %279 = vmatpush1.msra.mxu0 0.0
    %280 = vmatprep.subr.mxu0 0.0
    %281 = vmatpush1.msra.mxu0 0.0
    %282 = vmatprep.subr.mxu0 0.0
    %283 = vmatpush1.msra.mxu0 0.0
    %284 = vmatprep.subr.mxu0 0.0
    %285 = vmatpush1.msra.mxu0 0.0
    %286 = vmatprep.subr.mxu0 0.0
    %287 = vmatpush1.msra.mxu0 0.0
    %288 = vmatprep.subr.mxu0 0.0
    %289 = vmatpush1.msra.mxu0 0.0
    %290 = vmatprep.subr.mxu0 0.0
    %291 = vmatpush1.msra.mxu0 0.0
    %292 = vmatprep.subr.mxu0 0.0
    %293 = vmatpush1.msra.mxu0 0.0
    %294 = vmatprep.subr.mxu0 0.0
    %295 = vmatpush1.msra.mxu0 0.0
    %296 = vmatprep.subr.mxu0 0.0
    %297 = vmatpush1.msra.mxu0 0.0
    %298 = vmatprep.subr.mxu0 0.0
    %299 = vmatpush1.msra.mxu0 0.0
    %300 = vmatprep.subr.mxu0 0.0
    %301 = vmatpush1.msra.mxu0 0.0
    %302 = vmatprep.subr.mxu0 0.0
    %303 = vmatpush1.msra.mxu0 0.0
    %304 = vmatprep.subr.mxu0 0.0
    %305 = vmatpush1.msra.mxu0 0.0
    %306 = vmatprep.subr.mxu0 0.0
    %v307 = vand.u32 %v30, 4294901760
    %v308 = vsub.f32 %v30, %v307
    %309 = vmatpush1.msra.mxu0 %v308
    %310 = vmatprep.subr.mxu0 0.0
    %v311 = vand.u32 %v29, 4294901760
    %v312 = vsub.f32 %v29, %v311
    %313 = vmatpush1.msra.mxu0 %v312
    %314 = vmatprep.subr.mxu0 0.0
    %315 = vmatpush2.msra.mxu0 0.0
    %316 = vmatprep.subr.mxu0 0.0
    %317 = vmatpush2.msra.mxu0 0.0
    %318 = vmatprep.subr.mxu0 0.0
    %319 = vmatpush2.msra.mxu0 0.0
    %320 = vmatprep.subr.mxu0 0.0
    %321 = vmatpush2.msra.mxu0 0.0
    %322 = vmatprep.subr.mxu0 0.0
    %323 = vmatpush2.msra.mxu0 0.0
    %324 = vmatprep.subr.mxu0 0.0
    %325 = vmatpush2.msra.mxu0 0.0
    %326 = vmatprep.subr.mxu0 0.0
    %327 = vmatpush2.msra.mxu0 0.0
    %328 = vmatprep.subr.mxu0 0.0
    %329 = vmatpush2.msra.mxu0 0.0
    %330 = vmatprep.subr.mxu0 0.0
    %331 = vmatpush2.msra.mxu0 0.0
    %332 = vmatprep.subr.mxu0 0.0
    %333 = vmatpush2.msra.mxu0 0.0
    %334 = vmatprep.subr.mxu0 0.0
    %335 = vmatpush2.msra.mxu0 0.0
    %336 = vmatprep.subr.mxu0 0.0
    %337 = vmatpush2.msra.mxu0 0.0
    %338 = vmatprep.subr.mxu0 0.0
    %339 = vmatpush2.msra.mxu0 0.0
    %340 = vmatprep.subr.mxu0 0.0
    %341 = vmatpush2.msra.mxu0 0.0
    %342 = vmatprep.subr.mxu0 0.0
    %343 = vmatpush2.msra.mxu0 0.0
    %344 = vmatprep.subr.mxu0 0.0
    %345 = vmatpush2.msra.mxu0 0.0
    %346 = vmatprep.mubr.f32.mxu0 0.0
    %v347 = vand.u32 %v61, 4294901760
    %v348 = vsub.f32 %v61, %v347
    %349 = vmatmul.mubr.f32.gmra.mxu0 %v348
    %v350 = vpop.f32.mrf.mxu0
    %v351 = vadd.f32 %v257, %v350
    %v352 = vpop.f32.mrf.mxu0
    %353 = vmatprep.mubr.f32.mxu0 0.0
    %v354 = vand.u32 %v64, 4294901760
    %v355 = vsub.f32 %v64, %v354
    %356 = vmatmul.mubr.f32.gmra.mxu0 %v355
    %v357 = vpop.f32.mrf.mxu0
    %v358 = vadd.f32 %v263, %v357
    %v359 = vpop.f32.mrf.mxu0
    %360 = vmatprep.mubr.f32.mxu0 0.0
    %v361 = vand.u32 %v67, 4294901760
    %v362 = vsub.f32 %v67, %v361
    %363 = vmatmul.mubr.f32.gmra.mxu0 %v362
    %v364 = vpop.f32.mrf.mxu0
    %v365 = vadd.f32 %v269, %v364
    %v366 = vpop.f32.mrf.mxu0
    %367 = vmatprep.mubr.f32.mxu0 0.0
    %v368 = vand.u32 %v70, 4294901760
    %v369 = vsub.f32 %v70, %v368
    %370 = vmatmul.mubr.f32.gmra.mxu0 %v369
    %v371 = vpop.f32.mrf.mxu0
    %v372 = vadd.f32 %v275, %v371
    %v373 = vpop.f32.mrf.mxu0
    %374 = vdwg.mxu0
    %375 = vmatprep.subr.mxu0 0.0
    %376 = vmatpush1.msra.mxu0 0.0
    %377 = vmatprep.subr.mxu0 0.0
    %378 = vmatpush1.msra.mxu0 0.0
    %379 = vmatprep.subr.mxu0 0.0
    %380 = vmatpush1.msra.mxu0 0.0
    %381 = vmatprep.subr.mxu0 0.0
    %382 = vmatpush1.msra.mxu0 0.0
    %383 = vmatprep.subr.mxu0 0.0
    %384 = vmatpush1.msra.mxu0 0.0
    %385 = vmatprep.subr.mxu0 0.0
    %386 = vmatpush1.msra.mxu0 0.0
    %387 = vmatprep.subr.mxu0 0.0
    %388 = vmatpush1.msra.mxu0 0.0
    %389 = vmatprep.subr.mxu0 0.0
    %390 = vmatpush1.msra.mxu0 0.0
    %391 = vmatprep.subr.mxu0 0.0
    %392 = vmatpush1.msra.mxu0 0.0
    %393 = vmatprep.subr.mxu0 0.0
    %394 = vmatpush1.msra.mxu0 0.0
    %395 = vmatprep.subr.mxu0 0.0
    %396 = vmatpush1.msra.mxu0 0.0
    %397 = vmatprep.subr.mxu0 0.0
    %398 = vmatpush1.msra.mxu0 0.0
    %399 = vmatprep.subr.mxu0 0.0
    %400 = vmatpush1.msra.mxu0 0.0
    %401 = vmatprep.subr.mxu0 0.0
    %402 = vmatpush1.msra.mxu0 0.0
    %403 = vmatprep.subr.mxu0 0.0
    %v404 = vand.u32 %v30, 4294901760
    %405 = vmatpush1.msra.mxu0 %v404
    %406 = vmatprep.subr.mxu0 0.0
    %v407 = vand.u32 %v29, 4294901760
    %408 = vmatpush1.msra.mxu0 %v407
    %409 = vmatprep.subr.mxu0 0.0
    %410 = vmatpush2.msra.mxu0 0.0
    %411 = vmatprep.subr.mxu0 0.0
    %412 = vmatpush2.msra.mxu0 0.0
    %413 = vmatprep.subr.mxu0 0.0
    %414 = vmatpush2.msra.mxu0 0.0
    %415 = vmatprep.subr.mxu0 0.0
    %416 = vmatpush2.msra.mxu0 0.0
    %417 = vmatprep.subr.mxu0 0.0
    %418 = vmatpush2.msra.mxu0 0.0
    %419 = vmatprep.subr.mxu0 0.0
    %420 = vmatpush2.msra.mxu0 0.0
    %421 = vmatprep.subr.mxu0 0.0
    %422 = vmatpush2.msra.mxu0 0.0
    %423 = vmatprep.subr.mxu0 0.0
    %424 = vmatpush2.msra.mxu0 0.0
    %425 = vmatprep.subr.mxu0 0.0
    %426 = vmatpush2.msra.mxu0 0.0
    %427 = vmatprep.subr.mxu0 0.0
    %428 = vmatpush2.msra.mxu0 0.0
    %429 = vmatprep.subr.mxu0 0.0
    %430 = vmatpush2.msra.mxu0 0.0
    %431 = vmatprep.subr.mxu0 0.0
    %432 = vmatpush2.msra.mxu0 0.0
    %433 = vmatprep.subr.mxu0 0.0
    %434 = vmatpush2.msra.mxu0 0.0
    %435 = vmatprep.subr.mxu0 0.0
    %436 = vmatpush2.msra.mxu0 0.0
    %437 = vmatprep.subr.mxu0 0.0
    %438 = vmatpush2.msra.mxu0 0.0
    %439 = vmatprep.subr.mxu0 0.0
    %440 = vmatpush2.msra.mxu0 0.0
    %441 = vmatprep.mubr.f32.mxu0 0.0
    %v442 = vand.u32 %v61, 4294901760
    %v443 = vsub.f32 %v61, %v442
    %v444 = vand.u32 %v443, 4294901760
    %445 = vmatmul.mubr.f32.gmra.mxu0 %v444
    %v446 = vpop.f32.mrf.mxu0
    %v447 = vadd.f32 %v351, %v446
    %v448 = vpop.f32.mrf.mxu0
    %449 = vmatprep.mubr.f32.mxu0 0.0
    %v450 = vand.u32 %v64, 4294901760
    %v451 = vsub.f32 %v64, %v450
    %v452 = vand.u32 %v451, 4294901760
    %453 = vmatmul.mubr.f32.gmra.mxu0 %v452
    %v454 = vpop.f32.mrf.mxu0
    %v455 = vadd.f32 %v358, %v454
    %v456 = vpop.f32.mrf.mxu0
    %457 = vmatprep.mubr.f32.mxu0 0.0
    %v458 = vand.u32 %v67, 4294901760
    %v459 = vsub.f32 %v67, %v458
    %v460 = vand.u32 %v459, 4294901760
    %461 = vmatmul.mubr.f32.gmra.mxu0 %v460
    %v462 = vpop.f32.mrf.mxu0
    %v463 = vadd.f32 %v365, %v462
    %v464 = vpop.f32.mrf.mxu0
    %465 = vmatprep.mubr.f32.mxu0 0.0
    %v466 = vand.u32 %v70, 4294901760
    %v467 = vsub.f32 %v70, %v466
    %v468 = vand.u32 %v467, 4294901760
    %469 = vmatmul.mubr.f32.gmra.mxu0 %v468
    %v470 = vpop.f32.mrf.mxu0
    %v471 = vadd.f32 %v372, %v470
    %v472 = vpop.f32.mrf.mxu0
    %473 = vdwg.mxu0
    %474 = vmatprep.subr.mxu0 0.0
    %475 = vmatpush1.msra.mxu0 0.0
    %476 = vmatprep.subr.mxu0 0.0
    %477 = vmatpush1.msra.mxu0 0.0
    %478 = vmatprep.subr.mxu0 0.0
    %479 = vmatpush1.msra.mxu0 0.0
    %480 = vmatprep.subr.mxu0 0.0
    %481 = vmatpush1.msra.mxu0 0.0
    %482 = vmatprep.subr.mxu0 0.0
    %483 = vmatpush1.msra.mxu0 0.0
    %484 = vmatprep.subr.mxu0 0.0
    %485 = vmatpush1.msra.mxu0 0.0
    %486 = vmatprep.subr.mxu0 0.0
    %487 = vmatpush1.msra.mxu0 0.0
    %488 = vmatprep.subr.mxu0 0.0
    %489 = vmatpush1.msra.mxu0 0.0
    %490 = vmatprep.subr.mxu0 0.0
    %491 = vmatpush1.msra.mxu0 0.0
    %492 = vmatprep.subr.mxu0 0.0
    %493 = vmatpush1.msra.mxu0 0.0
    %494 = vmatprep.subr.mxu0 0.0
    %495 = vmatpush1.msra.mxu0 0.0
    %496 = vmatprep.subr.mxu0 0.0
    %497 = vmatpush1.msra.mxu0 0.0
    %498 = vmatprep.subr.mxu0 0.0
    %499 = vmatpush1.msra.mxu0 0.0
    %500 = vmatprep.subr.mxu0 0.0
    %501 = vmatpush1.msra.mxu0 0.0
    %502 = vmatprep.subr.mxu0 0.0
    %v503 = vand.u32 %v30, 4294901760
    %v504 = vsub.f32 %v30, %v503
    %v505 = vand.u32 %v504, 4294901760
    %506 = vmatpush1.msra.mxu0 %v505
    %507 = vmatprep.subr.mxu0 0.0
    %v508 = vand.u32 %v29, 4294901760
    %v509 = vsub.f32 %v29, %v508
    %v510 = vand.u32 %v509, 4294901760
    %511 = vmatpush1.msra.mxu0 %v510
    %512 = vmatprep.subr.mxu0 0.0
    %513 = vmatpush2.msra.mxu0 0.0
    %514 = vmatprep.subr.mxu0 0.0
    %515 = vmatpush2.msra.mxu0 0.0
    %516 = vmatprep.subr.mxu0 0.0
    %517 = vmatpush2.msra.mxu0 0.0
    %518 = vmatprep.subr.mxu0 0.0
    %519 = vmatpush2.msra.mxu0 0.0
    %520 = vmatprep.subr.mxu0 0.0
    %521 = vmatpush2.msra.mxu0 0.0
    %522 = vmatprep.subr.mxu0 0.0
    %523 = vmatpush2.msra.mxu0 0.0
    %524 = vmatprep.subr.mxu0 0.0
    %525 = vmatpush2.msra.mxu0 0.0
    %526 = vmatprep.subr.mxu0 0.0
    %527 = vmatpush2.msra.mxu0 0.0
    %528 = vmatprep.subr.mxu0 0.0
    %529 = vmatpush2.msra.mxu0 0.0
    %530 = vmatprep.subr.mxu0 0.0
    %531 = vmatpush2.msra.mxu0 0.0
    %532 = vmatprep.subr.mxu0 0.0
    %533 = vmatpush2.msra.mxu0 0.0
    %534 = vmatprep.subr.mxu0 0.0
    %535 = vmatpush2.msra.mxu0 0.0
    %536 = vmatprep.subr.mxu0 0.0
    %537 = vmatpush2.msra.mxu0 0.0
    %538 = vmatprep.subr.mxu0 0.0
    %539 = vmatpush2.msra.mxu0 0.0
    %540 = vmatprep.subr.mxu0 0.0
    %541 = vmatpush2.msra.mxu0 0.0
    %542 = vmatprep.subr.mxu0 0.0
    %543 = vmatpush2.msra.mxu0 0.0
    %544 = vmatprep.mubr.f32.mxu0 0.0
    %v545 = vand.u32 %v61, 4294901760
    %546 = vmatmul.mubr.f32.gmra.mxu0 %v545
    %v547 = vpop.f32.mrf.mxu0
    %v548 = vadd.f32 %v447, %v547
    %v549 = vpop.f32.mrf.mxu0
    %550 = vmatprep.mubr.f32.mxu0 0.0
    %v551 = vand.u32 %v64, 4294901760
    %552 = vmatmul.mubr.f32.gmra.mxu0 %v551
    %v553 = vpop.f32.mrf.mxu0
    %v554 = vadd.f32 %v455, %v553
    %v555 = vpop.f32.mrf.mxu0
    %556 = vmatprep.mubr.f32.mxu0 0.0
    %v557 = vand.u32 %v67, 4294901760
    %558 = vmatmul.mubr.f32.gmra.mxu0 %v557
    %v559 = vpop.f32.mrf.mxu0
    %v560 = vadd.f32 %v463, %v559
    %v561 = vpop.f32.mrf.mxu0
    %562 = vmatprep.mubr.f32.mxu0 0.0
    %v563 = vand.u32 %v70, 4294901760
    %564 = vmatmul.mubr.f32.gmra.mxu0 %v563
    %v565 = vpop.f32.mrf.mxu0
    %v566 = vadd.f32 %v471, %v565
    %v567 = vpop.f32.mrf.mxu0
    %568 = vdwg.mxu0
    %569 = vmatprep.subr.mxu0 0.0
    %570 = vmatpush1.msra.mxu0 0.0
    %571 = vmatprep.subr.mxu0 0.0
    %572 = vmatpush1.msra.mxu0 0.0
    %573 = vmatprep.subr.mxu0 0.0
    %574 = vmatpush1.msra.mxu0 0.0
    %575 = vmatprep.subr.mxu0 0.0
    %576 = vmatpush1.msra.mxu0 0.0
    %577 = vmatprep.subr.mxu0 0.0
    %578 = vmatpush1.msra.mxu0 0.0
    %579 = vmatprep.subr.mxu0 0.0
    %580 = vmatpush1.msra.mxu0 0.0
    %581 = vmatprep.subr.mxu0 0.0
    %582 = vmatpush1.msra.mxu0 0.0
    %583 = vmatprep.subr.mxu0 0.0
    %584 = vmatpush1.msra.mxu0 0.0
    %585 = vmatprep.subr.mxu0 0.0
    %586 = vmatpush1.msra.mxu0 0.0
    %587 = vmatprep.subr.mxu0 0.0
    %588 = vmatpush1.msra.mxu0 0.0
    %589 = vmatprep.subr.mxu0 0.0
    %590 = vmatpush1.msra.mxu0 0.0
    %591 = vmatprep.subr.mxu0 0.0
    %592 = vmatpush1.msra.mxu0 0.0
    %593 = vmatprep.subr.mxu0 0.0
    %594 = vmatpush1.msra.mxu0 0.0
    %595 = vmatprep.subr.mxu0 0.0
    %596 = vmatpush1.msra.mxu0 0.0
    %597 = vmatprep.subr.mxu0 0.0
    %v598 = vand.u32 %v30, 4294901760
    %599 = vmatpush1.msra.mxu0 %v598
    %600 = vmatprep.subr.mxu0 0.0
    %v601 = vand.u32 %v29, 4294901760
    %602 = vmatpush1.msra.mxu0 %v601
    %603 = vmatprep.subr.mxu0 0.0
    %604 = vmatpush2.msra.mxu0 0.0
    %605 = vmatprep.subr.mxu0 0.0
    %606 = vmatpush2.msra.mxu0 0.0
    %607 = vmatprep.subr.mxu0 0.0
    %608 = vmatpush2.msra.mxu0 0.0
    %609 = vmatprep.subr.mxu0 0.0
    %610 = vmatpush2.msra.mxu0 0.0
    %611 = vmatprep.subr.mxu0 0.0
    %612 = vmatpush2.msra.mxu0 0.0
    %613 = vmatprep.subr.mxu0 0.0
    %614 = vmatpush2.msra.mxu0 0.0
    %615 = vmatprep.subr.mxu0 0.0
    %616 = vmatpush2.msra.mxu0 0.0
    %617 = vmatprep.subr.mxu0 0.0
    %618 = vmatpush2.msra.mxu0 0.0
    %619 = vmatprep.subr.mxu0 0.0
    %620 = vmatpush2.msra.mxu0 0.0
    %621 = vmatprep.subr.mxu0 0.0
    %622 = vmatpush2.msra.mxu0 0.0
    %623 = vmatprep.subr.mxu0 0.0
    %624 = vmatpush2.msra.mxu0 0.0
    %625 = vmatprep.subr.mxu0 0.0
    %626 = vmatpush2.msra.mxu0 0.0
    %627 = vmatprep.subr.mxu0 0.0
    %628 = vmatpush2.msra.mxu0 0.0
    %629 = vmatprep.subr.mxu0 0.0
    %630 = vmatpush2.msra.mxu0 0.0
    %631 = vmatprep.subr.mxu0 0.0
    %632 = vmatpush2.msra.mxu0 0.0
    %633 = vmatprep.subr.mxu0 0.0
    %634 = vmatpush2.msra.mxu0 0.0
    %635 = vmatprep.mubr.f32.mxu0 0.0
    %v636 = vand.u32 %v61, 4294901760
    %637 = vmatmul.mubr.f32.gmra.mxu0 %v636
    %v638 = vpop.f32.mrf.mxu0
    %v639 = vadd.f32 %v548, %v638
    %v640 = vpop.f32.mrf.mxu0
    %641 = vmatprep.mubr.f32.mxu0 0.0
    %v642 = vand.u32 %v64, 4294901760
    %643 = vmatmul.mubr.f32.gmra.mxu0 %v642
    %v644 = vpop.f32.mrf.mxu0
    %v645 = vadd.f32 %v554, %v644
    %v646 = vpop.f32.mrf.mxu0
    %647 = vmatprep.mubr.f32.mxu0 0.0
    %v648 = vand.u32 %v67, 4294901760
    %649 = vmatmul.mubr.f32.gmra.mxu0 %v648
    %v650 = vpop.f32.mrf.mxu0
    %v651 = vadd.f32 %v560, %v650
    %v652 = vpop.f32.mrf.mxu0
    %653 = vmatprep.mubr.f32.mxu0 0.0
    %v654 = vand.u32 %v70, 4294901760
    %655 = vmatmul.mubr.f32.gmra.mxu0 %v654
    %v656 = vpop.f32.mrf.mxu0
    %v657 = vadd.f32 %v566, %v656
    %v658 = vpop.f32.mrf.mxu0
    %659 = vdwg.mxu0
    %v660 = vtanh.pop %v639
    %v661 = vtanh.pop %v645
    %v662 = vtanh.pop %v651
    %v663 = vtanh.pop %v657
    %v664 = vld [vmem:[#allocation2 + $0x8] sm:$0xff]
    %v665 = vld [vmem:[#allocation2 + $0x20] sm:$0xff]
    %v666 = vld [vmem:[#allocation2 + $0x38] sm:$0xff]
    %v667 = vld [vmem:[#allocation2 + $0x50] sm:$0xff]
    %668 = vset.pattern.permute.xlu0 1
    %669 = vperm.xlu0 %668, %v35
    %v670 = vpop.permute.xlu0 %669
    %672 = vset.pattern.permute.xlu0 1
    %673 = vperm.xlu0 %672, %v36
    %v674 = vpop.permute.xlu0 %673
    %676 = vset.pattern.permute.xlu0 1
    %677 = vperm.xlu0 %676, %v37
    %v678 = vpop.permute.xlu0 %677
    %680 = vset.pattern.permute.xlu0 1
    %681 = vperm.xlu0 %680, %v38
    %v682 = vpop.permute.xlu0 %681
    %vm684 = vcmask 261120
    %v686 = vsel %vm684, %v664, 0
    %v689 = vsel %vm684, %v665, 0
    %v692 = vsel %vm684, %v666, 0
    %v695 = vsel %vm684, %v667, 0
    %697 = vmatprep.subr.mxu0 0.0
    %698 = vmatpush1.msra.mxu0 0.0
    %699 = vmatprep.subr.mxu0 0.0
    %700 = vmatpush1.msra.mxu0 0.0
    %701 = vmatprep.subr.mxu0 0.0
    %702 = vmatpush1.msra.mxu0 0.0
    %703 = vmatprep.subr.mxu0 0.0
    %704 = vmatpush1.msra.mxu0 0.0
    %705 = vmatprep.subr.mxu0 0.0
    %706 = vmatpush1.msra.mxu0 0.0
    %707 = vmatprep.subr.mxu0 0.0
    %708 = vmatpush1.msra.mxu0 0.0
    %709 = vmatprep.subr.mxu0 0.0
    %710 = vmatpush1.msra.mxu0 0.0
    %711 = vmatprep.subr.mxu0 0.0
    %712 = vmatpush1.msra.mxu0 0.0
    %713 = vmatprep.subr.mxu0 0.0
    %714 = vmatpush1.msra.mxu0 0.0
    %715 = vmatprep.subr.mxu0 0.0
    %716 = vmatpush1.msra.mxu0 0.0
    %717 = vmatprep.subr.mxu0 0.0
    %718 = vmatpush1.msra.mxu0 0.0
    %719 = vmatprep.subr.mxu0 0.0
    %720 = vmatpush1.msra.mxu0 0.0
    %721 = vmatprep.subr.mxu0 0.0
    %v722 = vand.u32 %v663, 4294901760
    %723 = vmatpush1.msra.mxu0 %v722
    %724 = vmatprep.subr.mxu0 0.0
    %v725 = vand.u32 %v662, 4294901760
    %726 = vmatpush1.msra.mxu0 %v725
    %727 = vmatprep.subr.mxu0 0.0
    %v728 = vand.u32 %v661, 4294901760
    %729 = vmatpush1.msra.mxu0 %v728
    %730 = vmatprep.subr.mxu0 0.0
    %v731 = vand.u32 %v660, 4294901760
    %732 = vmatpush1.msra.mxu0 %v731
    %733 = vmatprep.subr.mxu0 0.0
    %734 = vmatpush2.msra.mxu0 0.0
    %735 = vmatprep.subr.mxu0 0.0
    %736 = vmatpush2.msra.mxu0 0.0
    %737 = vmatprep.subr.mxu0 0.0
    %738 = vmatpush2.msra.mxu0 0.0
    %739 = vmatprep.subr.mxu0 0.0
    %740 = vmatpush2.msra.mxu0 0.0
    %741 = vmatprep.subr.mxu0 0.0
    %742 = vmatpush2.msra.mxu0 0.0
    %743 = vmatprep.subr.mxu0 0.0
    %744 = vmatpush2.msra.mxu0 0.0
    %745 = vmatprep.subr.mxu0 0.0
    %746 = vmatpush2.msra.mxu0 0.0
    %747 = vmatprep.subr.mxu0 0.0
    %748 = vmatpush2.msra.mxu0 0.0
    %749 = vmatprep.subr.mxu0 0.0
    %750 = vmatpush2.msra.mxu0 0.0
    %751 = vmatprep.subr.mxu0 0.0
    %752 = vmatpush2.msra.mxu0 0.0
    %753 = vmatprep.subr.mxu0 0.0
    %754 = vmatpush2.msra.mxu0 0.0
    %755 = vmatprep.subr.mxu0 0.0
    %756 = vmatpush2.msra.mxu0 0.0
    %757 = vmatprep.subr.mxu0 0.0
    %758 = vmatpush2.msra.mxu0 0.0
    %759 = vmatprep.subr.mxu0 0.0
    %760 = vmatpush2.msra.mxu0 0.0
    %761 = vmatprep.subr.mxu0 0.0
    %762 = vmatpush2.msra.mxu0 0.0
    %763 = vmatprep.subr.mxu0 0.0
    %764 = vmatpush2.msra.mxu0 0.0
    %765 = vmatprep.mubr.f32.mxu0 0.0
    %v766 = vand.u32 %v686, 4294901760
    %v767 = vsub.f32 %v686, %v766
    %v768 = vand.u32 %v767, 4294901760
    %v769 = vsub.f32 %v767, %v768
    %v770 = vand.u32 %v769, 4294901760
    %771 = vmatmul.mubr.f32.gmra.mxu0 %v770
    %v772 = vpop.f32.mrf.mxu0
    %v773 = vadd.f32 %v670, %v772
    %v774 = vpop.f32.mrf.mxu0
    %775 = vmatprep.mubr.f32.mxu0 0.0
    %v776 = vand.u32 %v689, 4294901760
    %v777 = vsub.f32 %v689, %v776
    %v778 = vand.u32 %v777, 4294901760
    %v779 = vsub.f32 %v777, %v778
    %v780 = vand.u32 %v779, 4294901760
    %781 = vmatmul.mubr.f32.gmra.mxu0 %v780
    %v782 = vpop.f32.mrf.mxu0
    %v783 = vadd.f32 %v674, %v782
    %v784 = vpop.f32.mrf.mxu0
    %785 = vmatprep.mubr.f32.mxu0 0.0
    %v786 = vand.u32 %v692, 4294901760
    %v787 = vsub.f32 %v692, %v786
    %v788 = vand.u32 %v787, 4294901760
    %v789 = vsub.f32 %v787, %v788
    %v790 = vand.u32 %v789, 4294901760
    %791 = vmatmul.mubr.f32.gmra.mxu0 %v790
    %v792 = vpop.f32.mrf.mxu0
    %v793 = vadd.f32 %v678, %v792
    %v794 = vpop.f32.mrf.mxu0
    %795 = vmatprep.mubr.f32.mxu0 0.0
    %v796 = vand.u32 %v695, 4294901760
    %v797 = vsub.f32 %v695, %v796
    %v798 = vand.u32 %v797, 4294901760
    %v799 = vsub.f32 %v797, %v798
    %v800 = vand.u32 %v799, 4294901760
    %801 = vmatmul.mubr.f32.gmra.mxu0 %v800
    %v802 = vpop.f32.mrf.mxu0
    %v803 = vadd.f32 %v682, %v802
    %v804 = vpop.f32.mrf.mxu0
    %805 = vdwg.mxu0
    %806 = vmatprep.subr.mxu0 0.0
    %807 = vmatpush1.msra.mxu0 0.0
    %808 = vmatprep.subr.mxu0 0.0
    %809 = vmatpush1.msra.mxu0 0.0
    %810 = vmatprep.subr.mxu0 0.0
    %811 = vmatpush1.msra.mxu0 0.0
    %812 = vmatprep.subr.mxu0 0.0
    %813 = vmatpush1.msra.mxu0 0.0
    %814 = vmatprep.subr.mxu0 0.0
    %815 = vmatpush1.msra.mxu0 0.0
    %816 = vmatprep.subr.mxu0 0.0
    %817 = vmatpush1.msra.mxu0 0.0
    %818 = vmatprep.subr.mxu0 0.0
    %819 = vmatpush1.msra.mxu0 0.0
    %820 = vmatprep.subr.mxu0 0.0
    %821 = vmatpush1.msra.mxu0 0.0
    %822 = vmatprep.subr.mxu0 0.0
    %823 = vmatpush1.msra.mxu0 0.0
    %824 = vmatprep.subr.mxu0 0.0
    %825 = vmatpush1.msra.mxu0 0.0
    %826 = vmatprep.subr.mxu0 0.0
    %827 = vmatpush1.msra.mxu0 0.0
    %828 = vmatprep.subr.mxu0 0.0
    %829 = vmatpush1.msra.mxu0 0.0
    %830 = vmatprep.subr.mxu0 0.0
    %v831 = vand.u32 %v663, 4294901760
    %v832 = vsub.f32 %v663, %v831
    %v833 = vand.u32 %v832, 4294901760
    %v834 = vsub.f32 %v832, %v833
    %v835 = vand.u32 %v834, 4294901760
    %836 = vmatpush1.msra.mxu0 %v835
    %837 = vmatprep.subr.mxu0 0.0
    %v838 = vand.u32 %v662, 4294901760
    %v839 = vsub.f32 %v662, %v838
    %v840 = vand.u32 %v839, 4294901760
    %v841 = vsub.f32 %v839, %v840
    %v842 = vand.u32 %v841, 4294901760
    %843 = vmatpush1.msra.mxu0 %v842
    %844 = vmatprep.subr.mxu0 0.0
    %v845 = vand.u32 %v661, 4294901760
    %v846 = vsub.f32 %v661, %v845
    %v847 = vand.u32 %v846, 4294901760
    %v848 = vsub.f32 %v846, %v847
    %v849 = vand.u32 %v848, 4294901760
    %850 = vmatpush1.msra.mxu0 %v849
    %851 = vmatprep.subr.mxu0 0.0
    %v852 = vand.u32 %v660, 4294901760
    %v853 = vsub.f32 %v660, %v852
    %v854 = vand.u32 %v853, 4294901760
    %v855 = vsub.f32 %v853, %v854
    %v856 = vand.u32 %v855, 4294901760
    %857 = vmatpush1.msra.mxu0 %v856
    %858 = vmatprep.subr.mxu0 0.0
    %859 = vmatpush2.msra.mxu0 0.0
    %860 = vmatprep.subr.mxu0 0.0
    %861 = vmatpush2.msra.mxu0 0.0
    %862 = vmatprep.subr.mxu0 0.0
    %863 = vmatpush2.msra.mxu0 0.0
    %864 = vmatprep.subr.mxu0 0.0
    %865 = vmatpush2.msra.mxu0 0.0
    %866 = vmatprep.subr.mxu0 0.0
    %867 = vmatpush2.msra.mxu0 0.0
    %868 = vmatprep.subr.mxu0 0.0
    %869 = vmatpush2.msra.mxu0 0.0
    %870 = vmatprep.subr.mxu0 0.0
    %871 = vmatpush2.msra.mxu0 0.0
    %872 = vmatprep.subr.mxu0 0.0
    %873 = vmatpush2.msra.mxu0 0.0
    %874 = vmatprep.subr.mxu0 0.0
    %875 = vmatpush2.msra.mxu0 0.0
    %876 = vmatprep.subr.mxu0 0.0
    %877 = vmatpush2.msra.mxu0 0.0
    %878 = vmatprep.subr.mxu0 0.0
    %879 = vmatpush2.msra.mxu0 0.0
    %880 = vmatprep.subr.mxu0 0.0
    %881 = vmatpush2.msra.mxu0 0.0
    %882 = vmatprep.subr.mxu0 0.0
    %883 = vmatpush2.msra.mxu0 0.0
    %884 = vmatprep.subr.mxu0 0.0
    %885 = vmatpush2.msra.mxu0 0.0
    %886 = vmatprep.subr.mxu0 0.0
    %887 = vmatpush2.msra.mxu0 0.0
    %888 = vmatprep.subr.mxu0 0.0
    %889 = vmatpush2.msra.mxu0 0.0
    %890 = vmatprep.mubr.f32.mxu0 0.0
    %v891 = vand.u32 %v686, 4294901760
    %892 = vmatmul.mubr.f32.gmra.mxu0 %v891
    %v893 = vpop.f32.mrf.mxu0
    %v894 = vadd.f32 %v773, %v893
    %v895 = vpop.f32.mrf.mxu0
    %896 = vmatprep.mubr.f32.mxu0 0.0
    %v897 = vand.u32 %v689, 4294901760
    %898 = vmatmul.mubr.f32.gmra.mxu0 %v897
    %v899 = vpop.f32.mrf.mxu0
    %v900 = vadd.f32 %v783, %v899
    %v901 = vpop.f32.mrf.mxu0
    %902 = vmatprep.mubr.f32.mxu0 0.0
    %v903 = vand.u32 %v692, 4294901760
    %904 = vmatmul.mubr.f32.gmra.mxu0 %v903
    %v905 = vpop.f32.mrf.mxu0
    %v906 = vadd.f32 %v793, %v905
    %v907 = vpop.f32.mrf.mxu0
    %908 = vmatprep.mubr.f32.mxu0 0.0
    %v909 = vand.u32 %v695, 4294901760
    %910 = vmatmul.mubr.f32.gmra.mxu0 %v909
    %v911 = vpop.f32.mrf.mxu0
    %v912 = vadd.f32 %v803, %v911
    %v913 = vpop.f32.mrf.mxu0
    %914 = vdwg.mxu0
    %915 = vmatprep.subr.mxu0 0.0
    %916 = vmatpush1.msra.mxu0 0.0
    %917 = vmatprep.subr.mxu0 0.0
    %918 = vmatpush1.msra.mxu0 0.0
    %919 = vmatprep.subr.mxu0 0.0
    %920 = vmatpush1.msra.mxu0 0.0
    %921 = vmatprep.subr.mxu0 0.0
    %922 = vmatpush1.msra.mxu0 0.0
    %923 = vmatprep.subr.mxu0 0.0
    %924 = vmatpush1.msra.mxu0 0.0
    %925 = vmatprep.subr.mxu0 0.0
    %926 = vmatpush1.msra.mxu0 0.0
    %927 = vmatprep.subr.mxu0 0.0
    %928 = vmatpush1.msra.mxu0 0.0
    %929 = vmatprep.subr.mxu0 0.0
    %930 = vmatpush1.msra.mxu0 0.0
    %931 = vmatprep.subr.mxu0 0.0
    %932 = vmatpush1.msra.mxu0 0.0
    %933 = vmatprep.subr.mxu0 0.0
    %934 = vmatpush1.msra.mxu0 0.0
    %935 = vmatprep.subr.mxu0 0.0
    %936 = vmatpush1.msra.mxu0 0.0
    %937 = vmatprep.subr.mxu0 0.0
    %938 = vmatpush1.msra.mxu0 0.0
    %939 = vmatprep.subr.mxu0 0.0
    %v940 = vand.u32 %v663, 4294901760
    %v941 = vsub.f32 %v663, %v940
    %942 = vmatpush1.msra.mxu0 %v941
    %943 = vmatprep.subr.mxu0 0.0
    %v944 = vand.u32 %v662, 4294901760
    %v945 = vsub.f32 %v662, %v944
    %946 = vmatpush1.msra.mxu0 %v945
    %947 = vmatprep.subr.mxu0 0.0
    %v948 = vand.u32 %v661, 4294901760
    %v949 = vsub.f32 %v661, %v948
    %950 = vmatpush1.msra.mxu0 %v949
    %951 = vmatprep.subr.mxu0 0.0
    %v952 = vand.u32 %v660, 4294901760
    %v953 = vsub.f32 %v660, %v952
    %954 = vmatpush1.msra.mxu0 %v953
    %955 = vmatprep.subr.mxu0 0.0
    %956 = vmatpush2.msra.mxu0 0.0
    %957 = vmatprep.subr.mxu0 0.0
    %958 = vmatpush2.msra.mxu0 0.0
    %959 = vmatprep.subr.mxu0 0.0
    %960 = vmatpush2.msra.mxu0 0.0
    %961 = vmatprep.subr.mxu0 0.0
    %962 = vmatpush2.msra.mxu0 0.0
    %963 = vmatprep.subr.mxu0 0.0
    %964 = vmatpush2.msra.mxu0 0.0
    %965 = vmatprep.subr.mxu0 0.0
    %966 = vmatpush2.msra.mxu0 0.0
    %967 = vmatprep.subr.mxu0 0.0
    %968 = vmatpush2.msra.mxu0 0.0
    %969 = vmatprep.subr.mxu0 0.0
    %970 = vmatpush2.msra.mxu0 0.0
    %971 = vmatprep.subr.mxu0 0.0
    %972 = vmatpush2.msra.mxu0 0.0
    %973 = vmatprep.subr.mxu0 0.0
    %974 = vmatpush2.msra.mxu0 0.0
    %975 = vmatprep.subr.mxu0 0.0
    %976 = vmatpush2.msra.mxu0 0.0
    %977 = vmatprep.subr.mxu0 0.0
    %978 = vmatpush2.msra.mxu0 0.0
    %979 = vmatprep.subr.mxu0 0.0
    %980 = vmatpush2.msra.mxu0 0.0
    %981 = vmatprep.subr.mxu0 0.0
    %982 = vmatpush2.msra.mxu0 0.0
    %983 = vmatprep.subr.mxu0 0.0
    %984 = vmatpush2.msra.mxu0 0.0
    %985 = vmatprep.subr.mxu0 0.0
    %986 = vmatpush2.msra.mxu0 0.0
    %987 = vmatprep.mubr.f32.mxu0 0.0
    %v988 = vand.u32 %v686, 4294901760
    %v989 = vsub.f32 %v686, %v988
    %990 = vmatmul.mubr.f32.gmra.mxu0 %v989
    %v991 = vpop.f32.mrf.mxu0
    %v992 = vadd.f32 %v894, %v991
    %v993 = vpop.f32.mrf.mxu0
    %994 = vmatprep.mubr.f32.mxu0 0.0
    %v995 = vand.u32 %v689, 4294901760
    %v996 = vsub.f32 %v689, %v995
    %997 = vmatmul.mubr.f32.gmra.mxu0 %v996
    %v998 = vpop.f32.mrf.mxu0
    %v999 = vadd.f32 %v900, %v998
    %v1000 = vpop.f32.mrf.mxu0
    %1001 = vmatprep.mubr.f32.mxu0 0.0
    %v1002 = vand.u32 %v692, 4294901760
    %v1003 = vsub.f32 %v692, %v1002
    %1004 = vmatmul.mubr.f32.gmra.mxu0 %v1003
    %v1005 = vpop.f32.mrf.mxu0
    %v1006 = vadd.f32 %v906, %v1005
    %v1007 = vpop.f32.mrf.mxu0
    %1008 = vmatprep.mubr.f32.mxu0 0.0
    %v1009 = vand.u32 %v695, 4294901760
    %v1010 = vsub.f32 %v695, %v1009
    %1011 = vmatmul.mubr.f32.gmra.mxu0 %v1010
    %v1012 = vpop.f32.mrf.mxu0
    %v1013 = vadd.f32 %v912, %v1012
    %v1014 = vpop.f32.mrf.mxu0
    %1015 = vdwg.mxu0
    %1016 = vmatprep.subr.mxu0 0.0
    %1017 = vmatpush1.msra.mxu0 0.0
    %1018 = vmatprep.subr.mxu0 0.0
    %1019 = vmatpush1.msra.mxu0 0.0
    %1020 = vmatprep.subr.mxu0 0.0
    %1021 = vmatpush1.msra.mxu0 0.0
    %1022 = vmatprep.subr.mxu0 0.0
    %1023 = vmatpush1.msra.mxu0 0.0
    %1024 = vmatprep.subr.mxu0 0.0
    %1025 = vmatpush1.msra.mxu0 0.0
    %1026 = vmatprep.subr.mxu0 0.0
    %1027 = vmatpush1.msra.mxu0 0.0
    %1028 = vmatprep.subr.mxu0 0.0
    %1029 = vmatpush1.msra.mxu0 0.0
    %1030 = vmatprep.subr.mxu0 0.0
    %1031 = vmatpush1.msra.mxu0 0.0
    %1032 = vmatprep.subr.mxu0 0.0
    %1033 = vmatpush1.msra.mxu0 0.0
    %1034 = vmatprep.subr.mxu0 0.0
    %1035 = vmatpush1.msra.mxu0 0.0
    %1036 = vmatprep.subr.mxu0 0.0
    %1037 = vmatpush1.msra.mxu0 0.0
    %1038 = vmatprep.subr.mxu0 0.0
    %1039 = vmatpush1.msra.mxu0 0.0
    %1040 = vmatprep.subr.mxu0 0.0
    %v1041 = vand.u32 %v663, 4294901760
    %1042 = vmatpush1.msra.mxu0 %v1041
    %1043 = vmatprep.subr.mxu0 0.0
    %v1044 = vand.u32 %v662, 4294901760
    %1045 = vmatpush1.msra.mxu0 %v1044
    %1046 = vmatprep.subr.mxu0 0.0
    %v1047 = vand.u32 %v661, 4294901760
    %1048 = vmatpush1.msra.mxu0 %v1047
    %1049 = vmatprep.subr.mxu0 0.0
    %v1050 = vand.u32 %v660, 4294901760
    %1051 = vmatpush1.msra.mxu0 %v1050
    %1052 = vmatprep.subr.mxu0 0.0
    %1053 = vmatpush2.msra.mxu0 0.0
    %1054 = vmatprep.subr.mxu0 0.0
    %1055 = vmatpush2.msra.mxu0 0.0
    %1056 = vmatprep.subr.mxu0 0.0
    %1057 = vmatpush2.msra.mxu0 0.0
    %1058 = vmatprep.subr.mxu0 0.0
    %1059 = vmatpush2.msra.mxu0 0.0
    %1060 = vmatprep.subr.mxu0 0.0
    %1061 = vmatpush2.msra.mxu0 0.0
    %1062 = vmatprep.subr.mxu0 0.0
    %1063 = vmatpush2.msra.mxu0 0.0
    %1064 = vmatprep.subr.mxu0 0.0
    %1065 = vmatpush2.msra.mxu0 0.0
    %1066 = vmatprep.subr.mxu0 0.0
    %1067 = vmatpush2.msra.mxu0 0.0
    %1068 = vmatprep.subr.mxu0 0.0
    %1069 = vmatpush2.msra.mxu0 0.0
    %1070 = vmatprep.subr.mxu0 0.0
    %1071 = vmatpush2.msra.mxu0 0.0
    %1072 = vmatprep.subr.mxu0 0.0
    %1073 = vmatpush2.msra.mxu0 0.0
    %1074 = vmatprep.subr.mxu0 0.0
    %1075 = vmatpush2.msra.mxu0 0.0
    %1076 = vmatprep.subr.mxu0 0.0
    %1077 = vmatpush2.msra.mxu0 0.0
    %1078 = vmatprep.subr.mxu0 0.0
    %1079 = vmatpush2.msra.mxu0 0.0
    %1080 = vmatprep.subr.mxu0 0.0
    %1081 = vmatpush2.msra.mxu0 0.0
    %1082 = vmatprep.subr.mxu0 0.0
    %1083 = vmatpush2.msra.mxu0 0.0
    %1084 = vmatprep.mubr.f32.mxu0 0.0
    %v1085 = vand.u32 %v686, 4294901760
    %v1086 = vsub.f32 %v686, %v1085
    %v1087 = vand.u32 %v1086, 4294901760
    %1088 = vmatmul.mubr.f32.gmra.mxu0 %v1087
    %v1089 = vpop.f32.mrf.mxu0
    %v1090 = vadd.f32 %v992, %v1089
    %v1091 = vpop.f32.mrf.mxu0
    %1092 = vmatprep.mubr.f32.mxu0 0.0
    %v1093 = vand.u32 %v689, 4294901760
    %v1094 = vsub.f32 %v689, %v1093
    %v1095 = vand.u32 %v1094, 4294901760
    %1096 = vmatmul.mubr.f32.gmra.mxu0 %v1095
    %v1097 = vpop.f32.mrf.mxu0
    %v1098 = vadd.f32 %v999, %v1097
    %v1099 = vpop.f32.mrf.mxu0
    %1100 = vmatprep.mubr.f32.mxu0 0.0
    %v1101 = vand.u32 %v692, 4294901760
    %v1102 = vsub.f32 %v692, %v1101
    %v1103 = vand.u32 %v1102, 4294901760
    %1104 = vmatmul.mubr.f32.gmra.mxu0 %v1103
    %v1105 = vpop.f32.mrf.mxu0
    %v1106 = vadd.f32 %v1006, %v1105
    %v1107 = vpop.f32.mrf.mxu0
    %1108 = vmatprep.mubr.f32.mxu0 0.0
    %v1109 = vand.u32 %v695, 4294901760
    %v1110 = vsub.f32 %v695, %v1109
    %v1111 = vand.u32 %v1110, 4294901760
    %1112 = vmatmul.mubr.f32.gmra.mxu0 %v1111
    %v1113 = vpop.f32.mrf.mxu0
    %v1114 = vadd.f32 %v1013, %v1113
    %v1115 = vpop.f32.mrf.mxu0
    %1116 = vdwg.mxu0
    %1117 = vmatprep.subr.mxu0 0.0
    %1118 = vmatpush1.msra.mxu0 0.0
    %1119 = vmatprep.subr.mxu0 0.0
    %1120 = vmatpush1.msra.mxu0 0.0
    %1121 = vmatprep.subr.mxu0 0.0
    %1122 = vmatpush1.msra.mxu0 0.0
    %1123 = vmatprep.subr.mxu0 0.0
    %1124 = vmatpush1.msra.mxu0 0.0
    %1125 = vmatprep.subr.mxu0 0.0
    %1126 = vmatpush1.msra.mxu0 0.0
    %1127 = vmatprep.subr.mxu0 0.0
    %1128 = vmatpush1.msra.mxu0 0.0
    %1129 = vmatprep.subr.mxu0 0.0
    %1130 = vmatpush1.msra.mxu0 0.0
    %1131 = vmatprep.subr.mxu0 0.0
    %1132 = vmatpush1.msra.mxu0 0.0
    %1133 = vmatprep.subr.mxu0 0.0
    %1134 = vmatpush1.msra.mxu0 0.0
    %1135 = vmatprep.subr.mxu0 0.0
    %1136 = vmatpush1.msra.mxu0 0.0
    %1137 = vmatprep.subr.mxu0 0.0
    %1138 = vmatpush1.msra.mxu0 0.0
    %1139 = vmatprep.subr.mxu0 0.0
    %1140 = vmatpush1.msra.mxu0 0.0
    %1141 = vmatprep.subr.mxu0 0.0
    %v1142 = vand.u32 %v663, 4294901760
    %v1143 = vsub.f32 %v663, %v1142
    %v1144 = vand.u32 %v1143, 4294901760
    %1145 = vmatpush1.msra.mxu0 %v1144
    %1146 = vmatprep.subr.mxu0 0.0
    %v1147 = vand.u32 %v662, 4294901760
    %v1148 = vsub.f32 %v662, %v1147
    %v1149 = vand.u32 %v1148, 4294901760
    %1150 = vmatpush1.msra.mxu0 %v1149
    %1151 = vmatprep.subr.mxu0 0.0
    %v1152 = vand.u32 %v661, 4294901760
    %v1153 = vsub.f32 %v661, %v1152
    %v1154 = vand.u32 %v1153, 4294901760
    %1155 = vmatpush1.msra.mxu0 %v1154
    %1156 = vmatprep.subr.mxu0 0.0
    %v1157 = vand.u32 %v660, 4294901760
    %v1158 = vsub.f32 %v660, %v1157
    %v1159 = vand.u32 %v1158, 4294901760
    %1160 = vmatpush1.msra.mxu0 %v1159
    %1161 = vmatprep.subr.mxu0 0.0
    %1162 = vmatpush2.msra.mxu0 0.0
    %1163 = vmatprep.subr.mxu0 0.0
    %1164 = vmatpush2.msra.mxu0 0.0
    %1165 = vmatprep.subr.mxu0 0.0
    %1166 = vmatpush2.msra.mxu0 0.0
    %1167 = vmatprep.subr.mxu0 0.0
    %1168 = vmatpush2.msra.mxu0 0.0
    %1169 = vmatprep.subr.mxu0 0.0
    %1170 = vmatpush2.msra.mxu0 0.0
    %1171 = vmatprep.subr.mxu0 0.0
    %1172 = vmatpush2.msra.mxu0 0.0
    %1173 = vmatprep.subr.mxu0 0.0
    %1174 = vmatpush2.msra.mxu0 0.0
    %1175 = vmatprep.subr.mxu0 0.0
    %1176 = vmatpush2.msra.mxu0 0.0
    %1177 = vmatprep.subr.mxu0 0.0
    %1178 = vmatpush2.msra.mxu0 0.0
    %1179 = vmatprep.subr.mxu0 0.0
    %1180 = vmatpush2.msra.mxu0 0.0
    %1181 = vmatprep.subr.mxu0 0.0
    %1182 = vmatpush2.msra.mxu0 0.0
    %1183 = vmatprep.subr.mxu0 0.0
    %1184 = vmatpush2.msra.mxu0 0.0
    %1185 = vmatprep.subr.mxu0 0.0
    %1186 = vmatpush2.msra.mxu0 0.0
    %1187 = vmatprep.subr.mxu0 0.0
    %1188 = vmatpush2.msra.mxu0 0.0
    %1189 = vmatprep.subr.mxu0 0.0
    %1190 = vmatpush2.msra.mxu0 0.0
    %1191 = vmatprep.subr.mxu0 0.0
    %1192 = vmatpush2.msra.mxu0 0.0
    %1193 = vmatprep.mubr.f32.mxu0 0.0
    %v1194 = vand.u32 %v686, 4294901760
    %1195 = vmatmul.mubr.f32.gmra.mxu0 %v1194
    %v1196 = vpop.f32.mrf.mxu0
    %v1197 = vadd.f32 %v1090, %v1196
    %v1198 = vpop.f32.mrf.mxu0
    %1199 = vmatprep.mubr.f32.mxu0 0.0
    %v1200 = vand.u32 %v689, 4294901760
    %1201 = vmatmul.mubr.f32.gmra.mxu0 %v1200
    %v1202 = vpop.f32.mrf.mxu0
    %v1203 = vadd.f32 %v1098, %v1202
    %v1204 = vpop.f32.mrf.mxu0
    %1205 = vmatprep.mubr.f32.mxu0 0.0
    %v1206 = vand.u32 %v692, 4294901760
    %1207 = vmatmul.mubr.f32.gmra.mxu0 %v1206
    %v1208 = vpop.f32.mrf.mxu0
    %v1209 = vadd.f32 %v1106, %v1208
    %v1210 = vpop.f32.mrf.mxu0
    %1211 = vmatprep.mubr.f32.mxu0 0.0
    %v1212 = vand.u32 %v695, 4294901760
    %1213 = vmatmul.mubr.f32.gmra.mxu0 %v1212
    %v1214 = vpop.f32.mrf.mxu0
    %v1215 = vadd.f32 %v1114, %v1214
    %v1216 = vpop.f32.mrf.mxu0
    %1217 = vdwg.mxu0
    %1218 = vmatprep.subr.mxu0 0.0
    %1219 = vmatpush1.msra.mxu0 0.0
    %1220 = vmatprep.subr.mxu0 0.0
    %1221 = vmatpush1.msra.mxu0 0.0
    %1222 = vmatprep.subr.mxu0 0.0
    %1223 = vmatpush1.msra.mxu0 0.0
    %1224 = vmatprep.subr.mxu0 0.0
    %1225 = vmatpush1.msra.mxu0 0.0
    %1226 = vmatprep.subr.mxu0 0.0
    %1227 = vmatpush1.msra.mxu0 0.0
    %1228 = vmatprep.subr.mxu0 0.0
    %1229 = vmatpush1.msra.mxu0 0.0
    %1230 = vmatprep.subr.mxu0 0.0
    %1231 = vmatpush1.msra.mxu0 0.0
    %1232 = vmatprep.subr.mxu0 0.0
    %1233 = vmatpush1.msra.mxu0 0.0
    %1234 = vmatprep.subr.mxu0 0.0
    %1235 = vmatpush1.msra.mxu0 0.0
    %1236 = vmatprep.subr.mxu0 0.0
    %1237 = vmatpush1.msra.mxu0 0.0
    %1238 = vmatprep.subr.mxu0 0.0
    %1239 = vmatpush1.msra.mxu0 0.0
    %1240 = vmatprep.subr.mxu0 0.0
    %1241 = vmatpush1.msra.mxu0 0.0
    %1242 = vmatprep.subr.mxu0 0.0
    %v1243 = vand.u32 %v663, 4294901760
    %1244 = vmatpush1.msra.mxu0 %v1243
    %1245 = vmatprep.subr.mxu0 0.0
    %v1246 = vand.u32 %v662, 4294901760
    %1247 = vmatpush1.msra.mxu0 %v1246
    %1248 = vmatprep.subr.mxu0 0.0
    %v1249 = vand.u32 %v661, 4294901760
    %1250 = vmatpush1.msra.mxu0 %v1249
    %1251 = vmatprep.subr.mxu0 0.0
    %v1252 = vand.u32 %v660, 4294901760
    %1253 = vmatpush1.msra.mxu0 %v1252
    %1254 = vmatprep.subr.mxu0 0.0
    %1255 = vmatpush2.msra.mxu0 0.0
    %1256 = vmatprep.subr.mxu0 0.0
    %1257 = vmatpush2.msra.mxu0 0.0
    %1258 = vmatprep.subr.mxu0 0.0
    %1259 = vmatpush2.msra.mxu0 0.0
    %1260 = vmatprep.subr.mxu0 0.0
    %1261 = vmatpush2.msra.mxu0 0.0
    %1262 = vmatprep.subr.mxu0 0.0
    %1263 = vmatpush2.msra.mxu0 0.0
    %1264 = vmatprep.subr.mxu0 0.0
    %1265 = vmatpush2.msra.mxu0 0.0
    %1266 = vmatprep.subr.mxu0 0.0
    %1267 = vmatpush2.msra.mxu0 0.0
    %1268 = vmatprep.subr.mxu0 0.0
    %1269 = vmatpush2.msra.mxu0 0.0
    %1270 = vmatprep.subr.mxu0 0.0
    %1271 = vmatpush2.msra.mxu0 0.0
    %1272 = vmatprep.subr.mxu0 0.0
    %1273 = vmatpush2.msra.mxu0 0.0
    %1274 = vmatprep.subr.mxu0 0.0
    %1275 = vmatpush2.msra.mxu0 0.0
    %1276 = vmatprep.subr.mxu0 0.0
    %1277 = vmatpush2.msra.mxu0 0.0
    %1278 = vmatprep.subr.mxu0 0.0
    %1279 = vmatpush2.msra.mxu0 0.0
    %1280 = vmatprep.subr.mxu0 0.0
    %1281 = vmatpush2.msra.mxu0 0.0
    %1282 = vmatprep.subr.mxu0 0.0
    %1283 = vmatpush2.msra.mxu0 0.0
    %1284 = vmatprep.subr.mxu0 0.0
    %1285 = vmatpush2.msra.mxu0 0.0
    %1286 = vmatprep.mubr.f32.mxu0 0.0
    %v1287 = vand.u32 %v686, 4294901760
    %1288 = vmatmul.mubr.f32.gmra.mxu0 %v1287
    %v1289 = vpop.f32.mrf.mxu0
    %v1290 = vadd.f32 %v1197, %v1289
    %v1291 = vpop.f32.mrf.mxu0
    %1292 = vmatprep.mubr.f32.mxu0 0.0
    %v1293 = vand.u32 %v689, 4294901760
    %1294 = vmatmul.mubr.f32.gmra.mxu0 %v1293
    %v1295 = vpop.f32.mrf.mxu0
    %v1296 = vadd.f32 %v1203, %v1295
    %v1297 = vpop.f32.mrf.mxu0
    %1298 = vmatprep.mubr.f32.mxu0 0.0
    %v1299 = vand.u32 %v692, 4294901760
    %1300 = vmatmul.mubr.f32.gmra.mxu0 %v1299
    %v1301 = vpop.f32.mrf.mxu0
    %v1302 = vadd.f32 %v1209, %v1301
    %v1303 = vpop.f32.mrf.mxu0
    %1304 = vmatprep.mubr.f32.mxu0 0.0
    %v1305 = vand.u32 %v695, 4294901760
    %1306 = vmatmul.mubr.f32.gmra.mxu0 %v1305
    %v1307 = vpop.f32.mrf.mxu0
    %v1308 = vadd.f32 %v1215, %v1307
    %v1309 = vpop.f32.mrf.mxu0
    %1310 = vdwg.mxu0
    %v1311 = vtanh.pop %v1290
    %v1312 = vtanh.pop %v1296
    %v1313 = vtanh.pop %v1302
    %v1314 = vtanh.pop %v1308
    %v1315 = vld [vmem:[#allocation2 + $0x10] sm:$0xff]
    %v1316 = vld [vmem:[%s2] sm:$0xff]
    %1318 = vset.pattern.permute.xlu0 2
    %1319 = vperm.xlu0 %1318, %v1316
    %v1320 = vpop.permute.xlu0 %1319
    %v1323 = vsel %vm684, %v1315, 0
    %1325 = vmatprep.subr.mxu0 0.0
    %1326 = vmatpush1.msra.mxu0 0.0
    %1327 = vmatprep.subr.mxu0 0.0
    %1328 = vmatpush1.msra.mxu0 0.0
    %1329 = vmatprep.subr.mxu0 0.0
    %1330 = vmatpush1.msra.mxu0 0.0
    %1331 = vmatprep.subr.mxu0 0.0
    %1332 = vmatpush1.msra.mxu0 0.0
    %1333 = vmatprep.subr.mxu0 0.0
    %1334 = vmatpush1.msra.mxu0 0.0
    %1335 = vmatprep.subr.mxu0 0.0
    %1336 = vmatpush1.msra.mxu0 0.0
    %1337 = vmatprep.subr.mxu0 0.0
    %1338 = vmatpush1.msra.mxu0 0.0
    %1339 = vmatprep.subr.mxu0 0.0
    %1340 = vmatpush1.msra.mxu0 0.0
    %1341 = vmatprep.subr.mxu0 0.0
    %1342 = vmatpush1.msra.mxu0 0.0
    %1343 = vmatprep.subr.mxu0 0.0
    %1344 = vmatpush1.msra.mxu0 0.0
    %1345 = vmatprep.subr.mxu0 0.0
    %1346 = vmatpush1.msra.mxu0 0.0
    %1347 = vmatprep.subr.mxu0 0.0
    %1348 = vmatpush1.msra.mxu0 0.0
    %1349 = vmatprep.subr.mxu0 0.0
    %v1350 = vand.u32 %v1314, 4294901760
    %1351 = vmatpush1.msra.mxu0 %v1350
    %1352 = vmatprep.subr.mxu0 0.0
    %v1353 = vand.u32 %v1313, 4294901760
    %1354 = vmatpush1.msra.mxu0 %v1353
    %1355 = vmatprep.subr.mxu0 0.0
    %v1356 = vand.u32 %v1312, 4294901760
    %1357 = vmatpush1.msra.mxu0 %v1356
    %1358 = vmatprep.subr.mxu0 0.0
    %v1359 = vand.u32 %v1311, 4294901760
    %1360 = vmatpush1.msra.mxu0 %v1359
    %1361 = vmatprep.subr.mxu0 0.0
    %1362 = vmatpush2.msra.mxu0 0.0
    %1363 = vmatprep.subr.mxu0 0.0
    %1364 = vmatpush2.msra.mxu0 0.0
    %1365 = vmatprep.subr.mxu0 0.0
    %1366 = vmatpush2.msra.mxu0 0.0
    %1367 = vmatprep.subr.mxu0 0.0
    %1368 = vmatpush2.msra.mxu0 0.0
    %1369 = vmatprep.subr.mxu0 0.0
    %1370 = vmatpush2.msra.mxu0 0.0
    %1371 = vmatprep.subr.mxu0 0.0
    %1372 = vmatpush2.msra.mxu0 0.0
    %1373 = vmatprep.subr.mxu0 0.0
    %1374 = vmatpush2.msra.mxu0 0.0
    %1375 = vmatprep.subr.mxu0 0.0
    %1376 = vmatpush2.msra.mxu0 0.0
    %1377 = vmatprep.subr.mxu0 0.0
    %1378 = vmatpush2.msra.mxu0 0.0
    %1379 = vmatprep.subr.mxu0 0.0
    %1380 = vmatpush2.msra.mxu0 0.0
    %1381 = vmatprep.subr.mxu0 0.0
    %1382 = vmatpush2.msra.mxu0 0.0
    %1383 = vmatprep.subr.mxu0 0.0
    %1384 = vmatpush2.msra.mxu0 0.0
    %1385 = vmatprep.subr.mxu0 0.0
    %1386 = vmatpush2.msra.mxu0 0.0
    %1387 = vmatprep.subr.mxu0 0.0
    %1388 = vmatpush2.msra.mxu0 0.0
    %1389 = vmatprep.subr.mxu0 0.0
    %1390 = vmatpush2.msra.mxu0 0.0
    %1391 = vmatprep.subr.mxu0 0.0
    %1392 = vmatpush2.msra.mxu0 0.0
    %1393 = vmatprep.mubr.f32.mxu0 0.0
    %v1394 = vand.u32 %v1323, 4294901760
    %v1395 = vsub.f32 %v1323, %v1394
    %v1396 = vand.u32 %v1395, 4294901760
    %v1397 = vsub.f32 %v1395, %v1396
    %v1398 = vand.u32 %v1397, 4294901760
    %1399 = vmatmul.mubr.f32.gmra.mxu0 %v1398
    %v1400 = vpop.f32.mrf.mxu0
    %v1401 = vadd.f32 %v1320, %v1400
    %v1402 = vpop.f32.mrf.mxu0
    %1403 = vdwg.mxu0
    %1404 = vmatprep.subr.mxu0 0.0
    %1405 = vmatpush1.msra.mxu0 0.0
    %1406 = vmatprep.subr.mxu0 0.0
    %1407 = vmatpush1.msra.mxu0 0.0
    %1408 = vmatprep.subr.mxu0 0.0
    %1409 = vmatpush1.msra.mxu0 0.0
    %1410 = vmatprep.subr.mxu0 0.0
    %1411 = vmatpush1.msra.mxu0 0.0
    %1412 = vmatprep.subr.mxu0 0.0
    %1413 = vmatpush1.msra.mxu0 0.0
    %1414 = vmatprep.subr.mxu0 0.0
    %1415 = vmatpush1.msra.mxu0 0.0
    %1416 = vmatprep.subr.mxu0 0.0
    %1417 = vmatpush1.msra.mxu0 0.0
    %1418 = vmatprep.subr.mxu0 0.0
    %1419 = vmatpush1.msra.mxu0 0.0
    %1420 = vmatprep.subr.mxu0 0.0
    %1421 = vmatpush1.msra.mxu0 0.0
    %1422 = vmatprep.subr.mxu0 0.0
    %1423 = vmatpush1.msra.mxu0 0.0
    %1424 = vmatprep.subr.mxu0 0.0
    %1425 = vmatpush1.msra.mxu0 0.0
    %1426 = vmatprep.subr.mxu0 0.0
    %1427 = vmatpush1.msra.mxu0 0.0
    %1428 = vmatprep.subr.mxu0 0.0
    %v1429 = vand.u32 %v1314, 4294901760
    %v1430 = vsub.f32 %v1314, %v1429
    %v1431 = vand.u32 %v1430, 4294901760
    %v1432 = vsub.f32 %v1430, %v1431
    %v1433 = vand.u32 %v1432, 4294901760
    %1434 = vmatpush1.msra.mxu0 %v1433
    %1435 = vmatprep.subr.mxu0 0.0
    %v1436 = vand.u32 %v1313, 4294901760
    %v1437 = vsub.f32 %v1313, %v1436
    %v1438 = vand.u32 %v1437, 4294901760
    %v1439 = vsub.f32 %v1437, %v1438
    %v1440 = vand.u32 %v1439, 4294901760
    %1441 = vmatpush1.msra.mxu0 %v1440
    %1442 = vmatprep.subr.mxu0 0.0
    %v1443 = vand.u32 %v1312, 4294901760
    %v1444 = vsub.f32 %v1312, %v1443
    %v1445 = vand.u32 %v1444, 4294901760
    %v1446 = vsub.f32 %v1444, %v1445
    %v1447 = vand.u32 %v1446, 4294901760
    %1448 = vmatpush1.msra.mxu0 %v1447
    %1449 = vmatprep.subr.mxu0 0.0
    %v1450 = vand.u32 %v1311, 4294901760
    %v1451 = vsub.f32 %v1311, %v1450
    %v1452 = vand.u32 %v1451, 4294901760
    %v1453 = vsub.f32 %v1451, %v1452
    %v1454 = vand.u32 %v1453, 4294901760
    %1455 = vmatpush1.msra.mxu0 %v1454
    %1456 = vmatprep.subr.mxu0 0.0
    %1457 = vmatpush2.msra.mxu0 0.0
    %1458 = vmatprep.subr.mxu0 0.0
    %1459 = vmatpush2.msra.mxu0 0.0
    %1460 = vmatprep.subr.mxu0 0.0
    %1461 = vmatpush2.msra.mxu0 0.0
    %1462 = vmatprep.subr.mxu0 0.0
    %1463 = vmatpush2.msra.mxu0 0.0
    %1464 = vmatprep.subr.mxu0 0.0
    %1465 = vmatpush2.msra.mxu0 0.0
    %1466 = vmatprep.subr.mxu0 0.0
    %1467 = vmatpush2.msra.mxu0 0.0
    %1468 = vmatprep.subr.mxu0 0.0
    %1469 = vmatpush2.msra.mxu0 0.0
    %1470 = vmatprep.subr.mxu0 0.0
    %1471 = vmatpush2.msra.mxu0 0.0
    %1472 = vmatprep.subr.mxu0 0.0
    %1473 = vmatpush2.msra.mxu0 0.0
    %1474 = vmatprep.subr.mxu0 0.0
    %1475 = vmatpush2.msra.mxu0 0.0
    %1476 = vmatprep.subr.mxu0 0.0
    %1477 = vmatpush2.msra.mxu0 0.0
    %1478 = vmatprep.subr.mxu0 0.0
    %1479 = vmatpush2.msra.mxu0 0.0
    %1480 = vmatprep.subr.mxu0 0.0
    %1481 = vmatpush2.msra.mxu0 0.0
    %1482 = vmatprep.subr.mxu0 0.0
    %1483 = vmatpush2.msra.mxu0 0.0
    %1484 = vmatprep.subr.mxu0 0.0
    %1485 = vmatpush2.msra.mxu0 0.0
    %1486 = vmatprep.subr.mxu0 0.0
    %1487 = vmatpush2.msra.mxu0 0.0
    %1488 = vmatprep.mubr.f32.mxu0 0.0
    %v1489 = vand.u32 %v1323, 4294901760
    %1490 = vmatmul.mubr.f32.gmra.mxu0 %v1489
    %v1491 = vpop.f32.mrf.mxu0
    %v1492 = vadd.f32 %v1401, %v1491
    %v1493 = vpop.f32.mrf.mxu0
    %1494 = vdwg.mxu0
    %1495 = vmatprep.subr.mxu0 0.0
    %1496 = vmatpush1.msra.mxu0 0.0
    %1497 = vmatprep.subr.mxu0 0.0
    %1498 = vmatpush1.msra.mxu0 0.0
    %1499 = vmatprep.subr.mxu0 0.0
    %1500 = vmatpush1.msra.mxu0 0.0
    %1501 = vmatprep.subr.mxu0 0.0
    %1502 = vmatpush1.msra.mxu0 0.0
    %1503 = vmatprep.subr.mxu0 0.0
    %1504 = vmatpush1.msra.mxu0 0.0
    %1505 = vmatprep.subr.mxu0 0.0
    %1506 = vmatpush1.msra.mxu0 0.0
    %1507 = vmatprep.subr.mxu0 0.0
    %1508 = vmatpush1.msra.mxu0 0.0
    %1509 = vmatprep.subr.mxu0 0.0
    %1510 = vmatpush1.msra.mxu0 0.0
    %1511 = vmatprep.subr.mxu0 0.0
    %1512 = vmatpush1.msra.mxu0 0.0
    %1513 = vmatprep.subr.mxu0 0.0
    %1514 = vmatpush1.msra.mxu0 0.0
    %1515 = vmatprep.subr.mxu0 0.0
    %1516 = vmatpush1.msra.mxu0 0.0
    %1517 = vmatprep.subr.mxu0 0.0
    %1518 = vmatpush1.msra.mxu0 0.0
    %1519 = vmatprep.subr.mxu0 0.0
    %v1520 = vand.u32 %v1314, 4294901760
    %v1521 = vsub.f32 %v1314, %v1520
    %1522 = vmatpush1.msra.mxu0 %v1521
    %1523 = vmatprep.subr.mxu0 0.0
    %v1524 = vand.u32 %v1313, 4294901760
    %v1525 = vsub.f32 %v1313, %v1524
    %1526 = vmatpush1.msra.mxu0 %v1525
    %1527 = vmatprep.subr.mxu0 0.0
    %v1528 = vand.u32 %v1312, 4294901760
    %v1529 = vsub.f32 %v1312, %v1528
    %1530 = vmatpush1.msra.mxu0 %v1529
    %1531 = vmatprep.subr.mxu0 0.0
    %v1532 = vand.u32 %v1311, 4294901760
    %v1533 = vsub.f32 %v1311, %v1532
    %1534 = vmatpush1.msra.mxu0 %v1533
    %1535 = vmatprep.subr.mxu0 0.0
    %1536 = vmatpush2.msra.mxu0 0.0
    %1537 = vmatprep.subr.mxu0 0.0
    %1538 = vmatpush2.msra.mxu0 0.0
    %1539 = vmatprep.subr.mxu0 0.0
    %1540 = vmatpush2.msra.mxu0 0.0
    %1541 = vmatprep.subr.mxu0 0.0
    %1542 = vmatpush2.msra.mxu0 0.0
    %1543 = vmatprep.subr.mxu0 0.0
    %1544 = vmatpush2.msra.mxu0 0.0
    %1545 = vmatprep.subr.mxu0 0.0
    %1546 = vmatpush2.msra.mxu0 0.0
    %1547 = vmatprep.subr.mxu0 0.0
    %1548 = vmatpush2.msra.mxu0 0.0
    %1549 = vmatprep.subr.mxu0 0.0
    %1550 = vmatpush2.msra.mxu0 0.0
    %1551 = vmatprep.subr.mxu0 0.0
    %1552 = vmatpush2.msra.mxu0 0.0
    %1553 = vmatprep.subr.mxu0 0.0
    %1554 = vmatpush2.msra.mxu0 0.0
    %1555 = vmatprep.subr.mxu0 0.0
    %1556 = vmatpush2.msra.mxu0 0.0
    %1557 = vmatprep.subr.mxu0 0.0
    %1558 = vmatpush2.msra.mxu0 0.0
    %1559 = vmatprep.subr.mxu0 0.0
    %1560 = vmatpush2.msra.mxu0 0.0
    %1561 = vmatprep.subr.mxu0 0.0
    %1562 = vmatpush2.msra.mxu0 0.0
    %1563 = vmatprep.subr.mxu0 0.0
    %1564 = vmatpush2.msra.mxu0 0.0
    %1565 = vmatprep.subr.mxu0 0.0
    %1566 = vmatpush2.msra.mxu0 0.0
    %1567 = vmatprep.mubr.f32.mxu0 0.0
    %v1568 = vand.u32 %v1323, 4294901760
    %v1569 = vsub.f32 %v1323, %v1568
    %1570 = vmatmul.mubr.f32.gmra.mxu0 %v1569
    %v1571 = vpop.f32.mrf.mxu0
    %v1572 = vadd.f32 %v1492, %v1571
    %v1573 = vpop.f32.mrf.mxu0
    %1574 = vdwg.mxu0
    %1575 = vmatprep.subr.mxu0 0.0
    %1576 = vmatpush1.msra.mxu0 0.0
    %1577 = vmatprep.subr.mxu0 0.0
    %1578 = vmatpush1.msra.mxu0 0.0
    %1579 = vmatprep.subr.mxu0 0.0
    %1580 = vmatpush1.msra.mxu0 0.0
    %1581 = vmatprep.subr.mxu0 0.0
    %1582 = vmatpush1.msra.mxu0 0.0
    %1583 = vmatprep.subr.mxu0 0.0
    %1584 = vmatpush1.msra.mxu0 0.0
    %1585 = vmatprep.subr.mxu0 0.0
    %1586 = vmatpush1.msra.mxu0 0.0
    %1587 = vmatprep.subr.mxu0 0.0
    %1588 = vmatpush1.msra.mxu0 0.0
    %1589 = vmatprep.subr.mxu0 0.0
    %1590 = vmatpush1.msra.mxu0 0.0
    %1591 = vmatprep.subr.mxu0 0.0
    %1592 = vmatpush1.msra.mxu0 0.0
    %1593 = vmatprep.subr.mxu0 0.0
    %1594 = vmatpush1.msra.mxu0 0.0
    %1595 = vmatprep.subr.mxu0 0.0
    %1596 = vmatpush1.msra.mxu0 0.0
    %1597 = vmatprep.subr.mxu0 0.0
    %1598 = vmatpush1.msra.mxu0 0.0
    %1599 = vmatprep.subr.mxu0 0.0
    %v1600 = vand.u32 %v1314, 4294901760
    %1601 = vmatpush1.msra.mxu0 %v1600
    %1602 = vmatprep.subr.mxu0 0.0
    %v1603 = vand.u32 %v1313, 4294901760
    %1604 = vmatpush1.msra.mxu0 %v1603
    %1605 = vmatprep.subr.mxu0 0.0
    %v1606 = vand.u32 %v1312, 4294901760
    %1607 = vmatpush1.msra.mxu0 %v1606
    %1608 = vmatprep.subr.mxu0 0.0
    %v1609 = vand.u32 %v1311, 4294901760
    %1610 = vmatpush1.msra.mxu0 %v1609
    %1611 = vmatprep.subr.mxu0 0.0
    %1612 = vmatpush2.msra.mxu0 0.0
    %1613 = vmatprep.subr.mxu0 0.0
    %1614 = vmatpush2.msra.mxu0 0.0
    %1615 = vmatprep.subr.mxu0 0.0
    %1616 = vmatpush2.msra.mxu0 0.0
    %1617 = vmatprep.subr.mxu0 0.0
    %1618 = vmatpush2.msra.mxu0 0.0
    %1619 = vmatprep.subr.mxu0 0.0
    %1620 = vmatpush2.msra.mxu0 0.0
    %1621 = vmatprep.subr.mxu0 0.0
    %1622 = vmatpush2.msra.mxu0 0.0
    %1623 = vmatprep.subr.mxu0 0.0
    %1624 = vmatpush2.msra.mxu0 0.0
    %1625 = vmatprep.subr.mxu0 0.0
    %1626 = vmatpush2.msra.mxu0 0.0
    %1627 = vmatprep.subr.mxu0 0.0
    %1628 = vmatpush2.msra.mxu0 0.0
    %1629 = vmatprep.subr.mxu0 0.0
    %1630 = vmatpush2.msra.mxu0 0.0
    %1631 = vmatprep.subr.mxu0 0.0
    %1632 = vmatpush2.msra.mxu0 0.0
    %1633 = vmatprep.subr.mxu0 0.0
    %1634 = vmatpush2.msra.mxu0 0.0
    %1635 = vmatprep.subr.mxu0 0.0
    %1636 = vmatpush2.msra.mxu0 0.0
    %1637 = vmatprep.subr.mxu0 0.0
    %1638 = vmatpush2.msra.mxu0 0.0
    %1639 = vmatprep.subr.mxu0 0.0
    %1640 = vmatpush2.msra.mxu0 0.0
    %1641 = vmatprep.subr.mxu0 0.0
    %1642 = vmatpush2.msra.mxu0 0.0
    %1643 = vmatprep.mubr.f32.mxu0 0.0
    %v1644 = vand.u32 %v1323, 4294901760
    %v1645 = vsub.f32 %v1323, %v1644
    %v1646 = vand.u32 %v1645, 4294901760
    %1647 = vmatmul.mubr.f32.gmra.mxu0 %v1646
    %v1648 = vpop.f32.mrf.mxu0
    %v1649 = vadd.f32 %v1572, %v1648
    %v1650 = vpop.f32.mrf.mxu0
    %1651 = vdwg.mxu0
    %1652 = vmatprep.subr.mxu0 0.0
    %1653 = vmatpush1.msra.mxu0 0.0
    %1654 = vmatprep.subr.mxu0 0.0
    %1655 = vmatpush1.msra.mxu0 0.0
    %1656 = vmatprep.subr.mxu0 0.0
    %1657 = vmatpush1.msra.mxu0 0.0
    %1658 = vmatprep.subr.mxu0 0.0
    %1659 = vmatpush1.msra.mxu0 0.0
    %1660 = vmatprep.subr.mxu0 0.0
    %1661 = vmatpush1.msra.mxu0 0.0
    %1662 = vmatprep.subr.mxu0 0.0
    %1663 = vmatpush1.msra.mxu0 0.0
    %1664 = vmatprep.subr.mxu0 0.0
    %1665 = vmatpush1.msra.mxu0 0.0
    %1666 = vmatprep.subr.mxu0 0.0
    %1667 = vmatpush1.msra.mxu0 0.0
    %1668 = vmatprep.subr.mxu0 0.0
    %1669 = vmatpush1.msra.mxu0 0.0
    %1670 = vmatprep.subr.mxu0 0.0
    %1671 = vmatpush1.msra.mxu0 0.0
    %1672 = vmatprep.subr.mxu0 0.0
    %1673 = vmatpush1.msra.mxu0 0.0
    %1674 = vmatprep.subr.mxu0 0.0
    %1675 = vmatpush1.msra.mxu0 0.0
    %1676 = vmatprep.subr.mxu0 0.0
    %v1677 = vand.u32 %v1314, 4294901760
    %v1678 = vsub.f32 %v1314, %v1677
    %v1679 = vand.u32 %v1678, 4294901760
    %1680 = vmatpush1.msra.mxu0 %v1679
    %1681 = vmatprep.subr.mxu0 0.0
    %v1682 = vand.u32 %v1313, 4294901760
    %v1683 = vsub.f32 %v1313, %v1682
    %v1684 = vand.u32 %v1683, 4294901760
    %1685 = vmatpush1.msra.mxu0 %v1684
    %1686 = vmatprep.subr.mxu0 0.0
    %v1687 = vand.u32 %v1312, 4294901760
    %v1688 = vsub.f32 %v1312, %v1687
    %v1689 = vand.u32 %v1688, 4294901760
    %1690 = vmatpush1.msra.mxu0 %v1689
    %1691 = vmatprep.subr.mxu0 0.0
    %v1692 = vand.u32 %v1311, 4294901760
    %v1693 = vsub.f32 %v1311, %v1692
    %v1694 = vand.u32 %v1693, 4294901760
    %1695 = vmatpush1.msra.mxu0 %v1694
    %1696 = vmatprep.subr.mxu0 0.0
    %1697 = vmatpush2.msra.mxu0 0.0
    %1698 = vmatprep.subr.mxu0 0.0
    %1699 = vmatpush2.msra.mxu0 0.0
    %1700 = vmatprep.subr.mxu0 0.0
    %1701 = vmatpush2.msra.mxu0 0.0
    %1702 = vmatprep.subr.mxu0 0.0
    %1703 = vmatpush2.msra.mxu0 0.0
    %1704 = vmatprep.subr.mxu0 0.0
    %1705 = vmatpush2.msra.mxu0 0.0
    %1706 = vmatprep.subr.mxu0 0.0
    %1707 = vmatpush2.msra.mxu0 0.0
    %1708 = vmatprep.subr.mxu0 0.0
    %1709 = vmatpush2.msra.mxu0 0.0
    %1710 = vmatprep.subr.mxu0 0.0
    %1711 = vmatpush2.msra.mxu0 0.0
    %1712 = vmatprep.subr.mxu0 0.0
    %1713 = vmatpush2.msra.mxu0 0.0
    %1714 = vmatprep.subr.mxu0 0.0
    %1715 = vmatpush2.msra.mxu0 0.0
    %1716 = vmatprep.subr.mxu0 0.0
    %1717 = vmatpush2.msra.mxu0 0.0
    %1718 = vmatprep.subr.mxu0 0.0
    %1719 = vmatpush2.msra.mxu0 0.0
    %1720 = vmatprep.subr.mxu0 0.0
    %1721 = vmatpush2.msra.mxu0 0.0
    %1722 = vmatprep.subr.mxu0 0.0
    %1723 = vmatpush2.msra.mxu0 0.0
    %1724 = vmatprep.subr.mxu0 0.0
    %1725 = vmatpush2.msra.mxu0 0.0
    %1726 = vmatprep.subr.mxu0 0.0
    %1727 = vmatpush2.msra.mxu0 0.0
    %1728 = vmatprep.mubr.f32.mxu0 0.0
    %v1729 = vand.u32 %v1323, 4294901760
    %1730 = vmatmul.mubr.f32.gmra.mxu0 %v1729
    %v1731 = vpop.f32.mrf.mxu0
    %v1732 = vadd.f32 %v1649, %v1731
    %v1733 = vpop.f32.mrf.mxu0
    %1734 = vdwg.mxu0
    %1735 = vmatprep.subr.mxu0 0.0
    %1736 = vmatpush1.msra.mxu0 0.0
    %1737 = vmatprep.subr.mxu0 0.0
    %1738 = vmatpush1.msra.mxu0 0.0
    %1739 = vmatprep.subr.mxu0 0.0
    %1740 = vmatpush1.msra.mxu0 0.0
    %1741 = vmatprep.subr.mxu0 0.0
    %1742 = vmatpush1.msra.mxu0 0.0
    %1743 = vmatprep.subr.mxu0 0.0
    %1744 = vmatpush1.msra.mxu0 0.0
    %1745 = vmatprep.subr.mxu0 0.0
    %1746 = vmatpush1.msra.mxu0 0.0
    %1747 = vmatprep.subr.mxu0 0.0
    %1748 = vmatpush1.msra.mxu0 0.0
    %1749 = vmatprep.subr.mxu0 0.0
    %1750 = vmatpush1.msra.mxu0 0.0
    %1751 = vmatprep.subr.mxu0 0.0
    %1752 = vmatpush1.msra.mxu0 0.0
    %1753 = vmatprep.subr.mxu0 0.0
    %1754 = vmatpush1.msra.mxu0 0.0
    %1755 = vmatprep.subr.mxu0 0.0
    %1756 = vmatpush1.msra.mxu0 0.0
    %1757 = vmatprep.subr.mxu0 0.0
    %1758 = vmatpush1.msra.mxu0 0.0
    %1759 = vmatprep.subr.mxu0 0.0
    %v1760 = vand.u32 %v1314, 4294901760
    %1761 = vmatpush1.msra.mxu0 %v1760
    %1762 = vmatprep.subr.mxu0 0.0
    %v1763 = vand.u32 %v1313, 4294901760
    %1764 = vmatpush1.msra.mxu0 %v1763
    %1765 = vmatprep.subr.mxu0 0.0
    %v1766 = vand.u32 %v1312, 4294901760
    %1767 = vmatpush1.msra.mxu0 %v1766
    %1768 = vmatprep.subr.mxu0 0.0
    %v1769 = vand.u32 %v1311, 4294901760
    %1770 = vmatpush1.msra.mxu0 %v1769
    %1771 = vmatprep.subr.mxu0 0.0
    %1772 = vmatpush2.msra.mxu0 0.0
    %1773 = vmatprep.subr.mxu0 0.0
    %1774 = vmatpush2.msra.mxu0 0.0
    %1775 = vmatprep.subr.mxu0 0.0
    %1776 = vmatpush2.msra.mxu0 0.0
    %1777 = vmatprep.subr.mxu0 0.0
    %1778 = vmatpush2.msra.mxu0 0.0
    %1779 = vmatprep.subr.mxu0 0.0
    %1780 = vmatpush2.msra.mxu0 0.0
    %1781 = vmatprep.subr.mxu0 0.0
    %1782 = vmatpush2.msra.mxu0 0.0
    %1783 = vmatprep.subr.mxu0 0.0
    %1784 = vmatpush2.msra.mxu0 0.0
    %1785 = vmatprep.subr.mxu0 0.0
    %1786 = vmatpush2.msra.mxu0 0.0
    %1787 = vmatprep.subr.mxu0 0.0
    %1788 = vmatpush2.msra.mxu0 0.0
    %1789 = vmatprep.subr.mxu0 0.0
    %1790 = vmatpush2.msra.mxu0 0.0
    %1791 = vmatprep.subr.mxu0 0.0
    %1792 = vmatpush2.msra.mxu0 0.0
    %1793 = vmatprep.subr.mxu0 0.0
    %1794 = vmatpush2.msra.mxu0 0.0
    %1795 = vmatprep.subr.mxu0 0.0
    %1796 = vmatpush2.msra.mxu0 0.0
    %1797 = vmatprep.subr.mxu0 0.0
    %1798 = vmatpush2.msra.mxu0 0.0
    %1799 = vmatprep.subr.mxu0 0.0
    %1800 = vmatpush2.msra.mxu0 0.0
    %1801 = vmatprep.subr.mxu0 0.0
    %1802 = vmatpush2.msra.mxu0 0.0
    %1803 = vmatprep.mubr.f32.mxu0 0.0
    %v1804 = vand.u32 %v1323, 4294901760
    %1805 = vmatmul.mubr.f32.gmra.mxu0 %v1804
    %v1806 = vpop.f32.mrf.mxu0
    %v1807 = vadd.f32 %v1732, %v1806
    %v1808 = vpop.f32.mrf.mxu0
    %1809 = vdwg.mxu0
    %1810 = vst [vmem:[#allocation5] sm:$0xff] %v1807
    // Predicated region
    $region18: #{tpu_custom_call.1} parent=1 // pred_check
      _
    $region19: #{tpu_custom_call.1} parent=1 // pred_check_branch
      %1812 = sbr.rel (0) target = $region21
    $region20: #{tpu_custom_call.1} parent=1 // pred_region
      %s1814 = ssub.s32 128, 128
      %1815 = vsyncadd [#allocation4], %s1814
      %s1817 = sshll.u32 [#allocation5], 4
      %s1818 = int_to_ptr.vmem [resolvable:$true] %s1817
      %1820 = dma.vmem_to_hbm [thread:$0]  %s1818, 128, %s3, [#allocation4]
    $region21: #{tpu_custom_call.1} parent=1 // pred_fallthru
      _
    // Predicated region
    $region22: #{tpu_custom_call.1} parent=1 // pred_check
      _
    $region23: #{tpu_custom_call.1} parent=1 // pred_check_branch
      %1822 = sbr.rel (0) target = $region25
    $region24: #{tpu_custom_call.1} parent=1 // pred_region
      %1823 = dma.done [#allocation4], 128
    $region25: #{tpu_custom_call.1} parent=1 // pred_fallthru
      _
    %1824 = vsyncpa [#allocation3], 1
    %1825 = vsyncpa [#allocation4], 1

</llo_original>
